<compile_context>
chip_gen: v7x
topology: tpu7x:2x2x1
jax: 0.10.0
libtpu: 0.0.40
codegen_flags: <defaults>
</compile_context>

<pallas_src>
import functools

import jax
import jax.numpy as jnp
from jax import lax
from jax.experimental import pallas as pl
from jax.experimental.pallas import tpu as pltpu

BN_EPS = 1e-5
LANE = 128


def _round_up(x, m):
    return (x + m - 1) // m * m


def _relu6(x):
    return jnp.minimum(jnp.maximum(x, 0.0), 6.0)


def _fold_bn(gamma, beta, mean, var):
    scale = gamma / jnp.sqrt(var + BN_EPS)
    bias = beta - mean * scale
    return scale.astype(jnp.float32), bias.astype(jnp.float32)


def _pad_last(a, target):
    pad = target - a.shape[-1]
    if pad == 0:
        return a
    cfg = [(0, 0)] * (a.ndim - 1) + [(0, pad)]
    return jnp.pad(a, cfg)


def _snap_bf16(a):
    # bf16-representable values: the kernel feeds the MXU bf16 operands, so this
    # keeps the f32-reference comparison tight in the self-test.
    return a.astype(jnp.bfloat16).astype(jnp.float32)


# ----------------------------------------------------------------------------
# Pallas kernels
# ----------------------------------------------------------------------------
def _expand_kernel(x_ref, w3_ref, b1_ref, dws_ref, b2_ref, wpw_ref, b3_ref,
                   out_ref, *, wp, tile_pf, hidden_pad, cin, cout_pad, use_res):
    # 3x3 expand conv (stride 1, pad 1): 9 accumulating MXU dots on shifted
    # contiguous slices of the row-flattened, width-padded bf16 input tile.
    acc = jnp.zeros((tile_pf, hidden_pad), jnp.float32)
    for ky in range(3):
        for kx in range(3):
            tap = x_ref[0, 0, pl.ds(ky * wp + kx, tile_pf), :]   # (tile_pf, cin) bf16
            acc = acc + jnp.dot(tap, w3_ref[ky * 3 + kx],
                                preferred_element_type=jnp.float32)
    y = _relu6(acc + b1_ref[...])                 # BN1 (scale folded into w3) + ReLU6
    y = _relu6(y * dws_ref[...] + b2_ref[...])    # depthwise 1x1 * BN2 + ReLU6
    z = jnp.dot(y.astype(jnp.bfloat16), wpw_ref[...],
                preferred_element_type=jnp.float32)  # pointwise (BN3 scale folded)
    z = z + b3_ref[...]
    if use_res:
        # Residual = centre tap of the same input tile; added in f32.
        res = x_ref[0, 0, pl.ds(wp + 1, tile_pf), :].astype(jnp.float32)
        if cout_pad > cin:
            res = jnp.concatenate(
                [res, jnp.zeros((tile_pf, cout_pad - cin), jnp.float32)], axis=-1)
        z = z + res
    out_ref[0, 0] = z.astype(out_ref.dtype)


def _no_expand_kernel(x_ref, dws_ref, b2_ref, wpw_ref, b3_ref, out_ref,
                      *, cin, cout_pad, use_res):
    x = x_ref[0].astype(jnp.float32)              # (tile_p, cin)
    y = _relu6(x * dws_ref[...] + b2_ref[...])    # depthwise 1x1 * BN2 + ReLU6
    z = jnp.dot(y.astype(jnp.bfloat16), wpw_ref[...],
                preferred_element_type=jnp.float32)
    z = z + b3_ref[...]
    if use_res:
        res = x
        if cout_pad > cin:
            res = jnp.concatenate(
                [res, jnp.zeros((res.shape[0], cout_pad - cin), jnp.float32)],
                axis=-1)
        z = z + res
    out_ref[0] = z.astype(out_ref.dtype)


# ----------------------------------------------------------------------------
# Wrapper: layout conversion, BN folding into weights, spatial tiling.
# ----------------------------------------------------------------------------
def invert_residual_forward(x_nchw, params, *, stride, expand_ratio,
                            tile_h=None, tile_p=None):
    N, Cin, H, W = x_nchw.shape
    hidden = Cin * expand_ratio
    Cout = params["wpw"].shape[0]
    use_res = (stride == 1) and (Cin == Cout)
    cout_pad = _round_up(Cout, LANE)

    x = jnp.transpose(x_nchw, (0, 2, 3, 1))                     # NHWC, f32

    s2, b2 = _fold_bn(*params["bn2"])
    s3, b3 = _fold_bn(*params["bn3"])
    dws = params["wdw"].reshape(hidden) * s2                    # depthwise * BN2 scale
    wpw = jnp.transpose(params["wpw"].reshape(Cout, hidden)) * s3[None, :]
    b3p = _pad_last(b3, cout_pad).reshape(1, cout_pad)

    if expand_ratio != 1:
        hidden_pad = _round_up(hidden, LANE)
        s1, b1 = _fold_bn(*params["bn1"])
        w3 = jnp.transpose(params["w3"], (2, 3, 1, 0)).reshape(9, Cin, hidden)
        w3 = _pad_last(w3 * s1[None, None, :], hidden_pad).astype(jnp.bfloat16)
        b1p = _pad_last(b1, hidden_pad).reshape(1, hidden_pad)
        dwsp = _pad_last(dws, hidden_pad).reshape(1, hidden_pad)
        b2p = _pad_last(b2, hidden_pad).reshape(1, hidden_pad)
        wpwp = _pad_last(jnp.pad(wpw, ((0, hidden_pad - hidden), (0, 0))),
                         cout_pad).astype(jnp.bfloat16)

        # Spatial tiling: row tiles over the (pad=1) image, flattened so that
        # every 3x3 tap of the tile is one contiguous slice (columns j >= W per
        # row are junk and sliced off afterwards).
        Wp = W + 2
        if tile_h is None:
            tile_h = max(1, min(H, 512 // Wp))
        R = -(-H // tile_h)                         # number of row tiles
        tile_pf = tile_h * Wp                       # flat positions per tile
        L = _round_up((tile_h + 2) * Wp + 2, 8)     # tile + 2-row halo (+2 cols)

        xp = jnp.pad(x, ((0, 0), (1, 1), (1, 1), (0, 0))).astype(jnp.bfloat16)
        flat = xp.reshape(N, (H + 2) * Wp, Cin)
        need = (R - 1) * tile_pf + L
        flat = jnp.pad(flat, ((0, 0), (0, need - flat.shape[1]), (0, 0)))
        x_halo = jnp.stack([flat[:, r * tile_pf:r * tile_pf + L, :]
                            for r in range(R)], axis=1)          # (N, R, L, Cin)

        kernel = functools.partial(
            _expand_kernel, wp=Wp, tile_pf=tile_pf, hidden_pad=hidden_pad,
            cin=Cin, cout_pad=cout_pad, use_res=use_res)

        weights = [w3, b1p, dwsp, b2p, wpwp, b3p]
        w_specs = [pl.BlockSpec(w.shape, lambda n, r, _nd=w.ndim: (0,) * _nd)
                   for w in weights]
        in_specs = [pl.BlockSpec((1, 1, L, Cin), lambda n, r: (n, r, 0, 0))] + w_specs
        out_spec = pl.BlockSpec((1, 1, tile_pf, cout_pad),
                                lambda n, r: (n, r, 0, 0))
        out_shape = jax.ShapeDtypeStruct((N, R, tile_pf, cout_pad), jnp.float32)

        wbytes = sum(int(w.size) * w.dtype.itemsize for w in weights)
        est = (2 * (L * Cin * 2 + tile_pf * cout_pad * 4 + wbytes)
               + 4 * tile_pf * hidden_pad * 4 + (8 << 20))
        vmem_limit = int(min(max(est, 32 << 20), 64 << 20))

        out = pl.pallas_call(
            kernel,
            out_shape=out_shape,
            grid=(N, R),
            in_specs=in_specs,
            out_specs=out_spec,
            compiler_params=pltpu.CompilerParams(
                dimension_semantics=("parallel", "parallel"),
                vmem_limit_bytes=vmem_limit),
        )(x_halo, *weights)

        out = out.reshape(N, R * tile_h, Wp, cout_pad)[:, :H, :W, :Cout]
        if stride != 1:
            # TODO(synk): stride-2 expansion blocks run the fused block at
            # stride-1 resolution and subsample here (extra work on those
            # layers); a phase-decomposed tap layout would avoid it.
            out = out[:, ::stride, ::stride, :]
    else:
        Ho = (H - 1) // stride + 1
        Wo = (W - 1) // stride + 1
        P = Ho * Wo
        xs = x[:, ::stride, ::stride, :].astype(jnp.bfloat16).reshape(N, P, Cin)
        if tile_p is None:
            tile_p = min(_round_up(P, 8), 512)
        P_pad = _round_up(P, tile_p)
        xs = jnp.pad(xs, ((0, 0), (0, P_pad - P), (0, 0)))
        R = P_pad // tile_p

        dwsp = dws.reshape(1, hidden)
        b2p = b2.reshape(1, hidden)
        wpwp = _pad_last(wpw, cout_pad).astype(jnp.bfloat16)

        kernel = functools.partial(_no_expand_kernel, cin=Cin,
                                   cout_pad=cout_pad, use_res=use_res)
        weights = [dwsp, b2p, wpwp, b3p]
        w_specs = [pl.BlockSpec(w.shape, lambda n, r, _nd=w.ndim: (0,) * _nd)
                   for w in weights]
        in_specs = [pl.BlockSpec((1, tile_p, Cin), lambda n, r: (n, r, 0))] + w_specs
        out_spec = pl.BlockSpec((1, tile_p, cout_pad), lambda n, r: (n, r, 0))
        out_shape = jax.ShapeDtypeStruct((N, P_pad, cout_pad), jnp.float32)

        wbytes = sum(int(w.size) * w.dtype.itemsize for w in weights)
        est = (2 * (tile_p * Cin * 2 + tile_p * cout_pad * 4 + wbytes)
               + 4 * tile_p * max(hidden, cout_pad) * 4 + (8 << 20))
        vmem_limit = int(min(max(est, 32 << 20), 64 << 20))

        out = pl.pallas_call(
            kernel,
            out_shape=out_shape,
            grid=(N, R),
            in_specs=in_specs,
            out_specs=out_spec,
            compiler_params=pltpu.CompilerParams(
                dimension_semantics=("parallel", "parallel"),
                vmem_limit_bytes=vmem_limit),
        )(xs, *weights)

        out = out[:, :P, :Cout].reshape(N, Ho, Wo, Cout)

    return jnp.transpose(out, (0, 3, 1, 2))                      # back to NCHW


# ----------------------------------------------------------------------------
# Deterministic parameter init (mirrors shapes from the PyTorch __init__)
# ----------------------------------------------------------------------------
def _bn_init(key, C):
    k1, k2, k3 = jax.random.split(key, 3)
    # gamma = power of two and var = 1 - eps  =>  folded scale gamma/sqrt(var+eps)
    # is exact, so folding it into bf16 weights is bit-exact and the f32
    # reference comparison stays tight for a bf16-MXU kernel.
    gamma = 2.0 ** jax.random.randint(k1, (C,), -1, 2).astype(jnp.float32)
    beta = 0.1 * jax.random.normal(k2, (C,), jnp.float32)
    mean = 0.1 * jax.random.normal(k3, (C,), jnp.float32)
    var = jnp.full((C,), 1.0 - BN_EPS, jnp.float32)
    return gamma, beta, mean, var


def init_params(key, Cin, Cout, expand_ratio):
    hidden = Cin * expand_ratio
    keys = jax.random.split(key, 6)
    params = {}
    if expand_ratio != 1:
        params["w3"] = _snap_bf16(
            0.2 * jax.random.normal(keys[0], (hidden, Cin, 3, 3), jnp.float32))
        params["bn1"] = _bn_init(keys[1], hidden)
    params["wdw"] = 1.0 + 0.5 * jax.random.normal(keys[2], (hidden, 1, 1, 1),
                                                  jnp.float32)
    params["bn2"] = _bn_init(keys[3], hidden)
    params["wpw"] = _snap_bf16(
        0.2 * jax.random.normal(keys[4], (Cout, hidden, 1, 1), jnp.float32))
    params["bn3"] = _bn_init(keys[5], Cout)
    return params


# ----------------------------------------------------------------------------
# Pure-JAX reference (mirrors the PyTorch forward, BN in eval mode)
# ----------------------------------------------------------------------------
def reference(x, params, *, stride, expand_ratio):
    Cin = x.shape[1]
    hidden = Cin * expand_ratio
    Cout = params["wpw"].shape[0]
    use_res = (stride == 1) and (Cin == Cout)
    dn = ("NCHW", "OIHW", "NCHW")

    def bn(y, p):
        g, b, m, v = (t[None, :, None, None] for t in p)
        return (y - m) / jnp.sqrt(v + BN_EPS) * g + b

    y = x
    if expand_ratio != 1:
        y = lax.conv_general_dilated(y, params["w3"], (1, 1), ((1, 1), (1, 1)),
                                     dimension_numbers=dn)
        y = _relu6(bn(y, params["bn1"]))
    y = lax.conv_general_dilated(y, params["wdw"], (stride, stride),
                                 ((0, 0), (0, 0)), dimension_numbers=dn,
                                 feature_group_count=hidden)
    y = _relu6(bn(y, params["bn2"]))
    y = lax.conv_general_dilated(y, params["wpw"], (1, 1), ((0, 0), (0, 0)),
                                 dimension_numbers=dn)
    y = bn(y, params["bn3"])
    return x + y if use_res else y


if __name__ == "__main__":
    key = jax.random.PRNGKey(0)
    N, H, W = 2, 16, 16
    configs = [
        # (Cin, Cout, stride, expand_ratio)
        (4, 4, 1, 6),   # expansion + residual connection (main path)
        (4, 8, 2, 6),   # expansion, strided, no residual
        (4, 8, 2, 1),   # no expansion (expand_ratio == 1), strided
    ]
    for Cin, Cout, stride, er in configs:
        key, kx, kp = jax.random.split(key, 3)
        x = _snap_bf16(jax.random.normal(kx, (N, Cin, H, W), jnp.float32))
        params = init_params(kp, Cin, Cout, er)

        out = invert_residual_forward(x, params, stride=stride,
                                      expand_ratio=er, tile_h=8)
        out = jax.block_until_ready(out)

        ref = reference(x, params, stride=stride, expand_ratio=er)
        assert out.shape == ref.shape, (out.shape, ref.shape)
        max_err = float(jnp.max(jnp.abs(out - ref)))
        assert jnp.allclose(out, ref, atol=3e-2, rtol=3e-2), (
            f"cfg={(Cin, Cout, stride, er)} max_err={max_err}")

    print("KERNEL_OK")
</pallas_src>

<mosaic_0001>
module attributes {stable_mosaic.version = 11 : i64} {
  func.func @_expand_kernel(%arg0: i32, %arg1: i32, %arg2: memref<1x1x184x4xbf16, #tpu.memory_space<vmem>>, %arg3: memref<9x4x128xbf16, #tpu.memory_space<vmem>>, %arg4: memref<1x128xf32, #tpu.memory_space<vmem>>, %arg5: memref<1x128xf32, #tpu.memory_space<vmem>>, %arg6: memref<1x128xf32, #tpu.memory_space<vmem>>, %arg7: memref<128x128xbf16, #tpu.memory_space<vmem>>, %arg8: memref<1x128xf32, #tpu.memory_space<vmem>>, %arg9: memref<1x1x144x128xf32, #tpu.memory_space<vmem>>) attributes {dimension_semantics = [#tpu.dimension_semantics<parallel>, #tpu.dimension_semantics<parallel>], iteration_bounds = array<i64: 2, 2>, scalar_prefetch = 0 : i64, scratch_operands = 0 : i64, tpu.core_type = #tpu.core_type<tc>, window_params = [{transform_indices = @transform_0, window_bounds = array<i64: 1, 1, 184, 4>}, {pipeline_mode = #tpu.pipeline_mode<synchronous>, transform_indices = @transform_1, window_bounds = array<i64: 9, 4, 128>}, {pipeline_mode = #tpu.pipeline_mode<synchronous>, transform_indices = @transform_2, window_bounds = array<i64: 1, 128>}, {pipeline_mode = #tpu.pipeline_mode<synchronous>, transform_indices = @transform_3, window_bounds = array<i64: 1, 128>}, {pipeline_mode = #tpu.pipeline_mode<synchronous>, transform_indices = @transform_4, window_bounds = array<i64: 1, 128>}, {pipeline_mode = #tpu.pipeline_mode<synchronous>, transform_indices = @transform_5, window_bounds = array<i64: 128, 128>}, {pipeline_mode = #tpu.pipeline_mode<synchronous>, transform_indices = @transform_6, window_bounds = array<i64: 1, 128>}, {transform_indices = @transform_7, window_bounds = array<i64: 1, 1, 144, 128>}]} {
    %cst = arith.constant 0.000000e+00 : f32
    %0 = vector.broadcast %cst : f32 to vector<144x128xf32>
    %c0 = arith.constant 0 : index
    %c0_0 = arith.constant 0 : index
    %c0_1 = arith.constant 0 : index
    %c0_2 = arith.constant 0 : index
    %1 = vector.load %arg2[%c0, %c0_0, %c0_1, %c0_2] : memref<1x1x184x4xbf16, #tpu.memory_space<vmem>>, vector<1x1x144x4xbf16>
    %2 = vector.shape_cast %1 : vector<1x1x144x4xbf16> to vector<144x4xbf16>
    %c0_3 = arith.constant 0 : index
    %c0_4 = arith.constant 0 : index
    %c0_5 = arith.constant 0 : index
    %3 = vector.load %arg3[%c0_3, %c0_4, %c0_5] : memref<9x4x128xbf16, #tpu.memory_space<vmem>>, vector<1x4x128xbf16>
    %4 = vector.shape_cast %3 : vector<1x4x128xbf16> to vector<4x128xbf16>
    %cst_6 = arith.constant dense<0.000000e+00> : vector<144x128xf32>
    %5 = tpu.matmul %2, %4, %cst_6 {dimension_numbers = #tpu.dot_dimension_numbers<[1], [0], [0], [1], [0, 0, 1, 1], [], []>} : vector<144x4xbf16>, vector<4x128xbf16>, vector<144x128xf32> -> vector<144x128xf32>
    %6 = arith.addf %0, %5 : vector<144x128xf32>
    %c0_7 = arith.constant 0 : index
    %c0_8 = arith.constant 0 : index
    %c1 = arith.constant 1 : index
    %c0_9 = arith.constant 0 : index
    %7 = vector.load %arg2[%c0_7, %c0_8, %c1, %c0_9] : memref<1x1x184x4xbf16, #tpu.memory_space<vmem>>, vector<1x1x144x4xbf16>
    %8 = vector.shape_cast %7 : vector<1x1x144x4xbf16> to vector<144x4xbf16>
    %c1_10 = arith.constant 1 : index
    %c0_11 = arith.constant 0 : index
    %c0_12 = arith.constant 0 : index
    %9 = vector.load %arg3[%c1_10, %c0_11, %c0_12] : memref<9x4x128xbf16, #tpu.memory_space<vmem>>, vector<1x4x128xbf16>
    %10 = vector.shape_cast %9 : vector<1x4x128xbf16> to vector<4x128xbf16>
    %cst_13 = arith.constant dense<0.000000e+00> : vector<144x128xf32>
    %11 = tpu.matmul %8, %10, %cst_13 {dimension_numbers = #tpu.dot_dimension_numbers<[1], [0], [0], [1], [0, 0, 1, 1], [], []>} : vector<144x4xbf16>, vector<4x128xbf16>, vector<144x128xf32> -> vector<144x128xf32>
    %12 = arith.addf %6, %11 : vector<144x128xf32>
    %c0_14 = arith.constant 0 : index
    %c0_15 = arith.constant 0 : index
    %c2 = arith.constant 2 : index
    %c0_16 = arith.constant 0 : index
    %13 = vector.load %arg2[%c0_14, %c0_15, %c2, %c0_16] : memref<1x1x184x4xbf16, #tpu.memory_space<vmem>>, vector<1x1x144x4xbf16>
    %14 = vector.shape_cast %13 : vector<1x1x144x4xbf16> to vector<144x4xbf16>
    %c2_17 = arith.constant 2 : index
    %c0_18 = arith.constant 0 : index
    %c0_19 = arith.constant 0 : index
    %15 = vector.load %arg3[%c2_17, %c0_18, %c0_19] : memref<9x4x128xbf16, #tpu.memory_space<vmem>>, vector<1x4x128xbf16>
    %16 = vector.shape_cast %15 : vector<1x4x128xbf16> to vector<4x128xbf16>
    %cst_20 = arith.constant dense<0.000000e+00> : vector<144x128xf32>
    %17 = tpu.matmul %14, %16, %cst_20 {dimension_numbers = #tpu.dot_dimension_numbers<[1], [0], [0], [1], [0, 0, 1, 1], [], []>} : vector<144x4xbf16>, vector<4x128xbf16>, vector<144x128xf32> -> vector<144x128xf32>
    %18 = arith.addf %12, %17 : vector<144x128xf32>
    %c0_21 = arith.constant 0 : index
    %c0_22 = arith.constant 0 : index
    %c18 = arith.constant 18 : index
    %c0_23 = arith.constant 0 : index
    %19 = vector.load %arg2[%c0_21, %c0_22, %c18, %c0_23] : memref<1x1x184x4xbf16, #tpu.memory_space<vmem>>, vector<1x1x144x4xbf16>
    %20 = vector.shape_cast %19 : vector<1x1x144x4xbf16> to vector<144x4xbf16>
    %c3 = arith.constant 3 : index
    %c0_24 = arith.constant 0 : index
    %c0_25 = arith.constant 0 : index
    %21 = vector.load %arg3[%c3, %c0_24, %c0_25] : memref<9x4x128xbf16, #tpu.memory_space<vmem>>, vector<1x4x128xbf16>
    %22 = vector.shape_cast %21 : vector<1x4x128xbf16> to vector<4x128xbf16>
    %cst_26 = arith.constant dense<0.000000e+00> : vector<144x128xf32>
    %23 = tpu.matmul %20, %22, %cst_26 {dimension_numbers = #tpu.dot_dimension_numbers<[1], [0], [0], [1], [0, 0, 1, 1], [], []>} : vector<144x4xbf16>, vector<4x128xbf16>, vector<144x128xf32> -> vector<144x128xf32>
    %24 = arith.addf %18, %23 : vector<144x128xf32>
    %c0_27 = arith.constant 0 : index
    %c0_28 = arith.constant 0 : index
    %c19 = arith.constant 19 : index
    %c0_29 = arith.constant 0 : index
    %25 = vector.load %arg2[%c0_27, %c0_28, %c19, %c0_29] : memref<1x1x184x4xbf16, #tpu.memory_space<vmem>>, vector<1x1x144x4xbf16>
    %26 = vector.shape_cast %25 : vector<1x1x144x4xbf16> to vector<144x4xbf16>
    %c4 = arith.constant 4 : index
    %c0_30 = arith.constant 0 : index
    %c0_31 = arith.constant 0 : index
    %27 = vector.load %arg3[%c4, %c0_30, %c0_31] : memref<9x4x128xbf16, #tpu.memory_space<vmem>>, vector<1x4x128xbf16>
    %28 = vector.shape_cast %27 : vector<1x4x128xbf16> to vector<4x128xbf16>
    %cst_32 = arith.constant dense<0.000000e+00> : vector<144x128xf32>
    %29 = tpu.matmul %26, %28, %cst_32 {dimension_numbers = #tpu.dot_dimension_numbers<[1], [0], [0], [1], [0, 0, 1, 1], [], []>} : vector<144x4xbf16>, vector<4x128xbf16>, vector<144x128xf32> -> vector<144x128xf32>
    %30 = arith.addf %24, %29 : vector<144x128xf32>
    %c0_33 = arith.constant 0 : index
    %c0_34 = arith.constant 0 : index
    %c20 = arith.constant 20 : index
    %c0_35 = arith.constant 0 : index
    %31 = vector.load %arg2[%c0_33, %c0_34, %c20, %c0_35] : memref<1x1x184x4xbf16, #tpu.memory_space<vmem>>, vector<1x1x144x4xbf16>
    %32 = vector.shape_cast %31 : vector<1x1x144x4xbf16> to vector<144x4xbf16>
    %c5 = arith.constant 5 : index
    %c0_36 = arith.constant 0 : index
    %c0_37 = arith.constant 0 : index
    %33 = vector.load %arg3[%c5, %c0_36, %c0_37] : memref<9x4x128xbf16, #tpu.memory_space<vmem>>, vector<1x4x128xbf16>
    %34 = vector.shape_cast %33 : vector<1x4x128xbf16> to vector<4x128xbf16>
    %cst_38 = arith.constant dense<0.000000e+00> : vector<144x128xf32>
    %35 = tpu.matmul %32, %34, %cst_38 {dimension_numbers = #tpu.dot_dimension_numbers<[1], [0], [0], [1], [0, 0, 1, 1], [], []>} : vector<144x4xbf16>, vector<4x128xbf16>, vector<144x128xf32> -> vector<144x128xf32>
    %36 = arith.addf %30, %35 : vector<144x128xf32>
    %c0_39 = arith.constant 0 : index
    %c0_40 = arith.constant 0 : index
    %c36 = arith.constant 36 : index
    %c0_41 = arith.constant 0 : index
    %37 = vector.load %arg2[%c0_39, %c0_40, %c36, %c0_41] : memref<1x1x184x4xbf16, #tpu.memory_space<vmem>>, vector<1x1x144x4xbf16>
    %38 = vector.shape_cast %37 : vector<1x1x144x4xbf16> to vector<144x4xbf16>
    %c6 = arith.constant 6 : index
    %c0_42 = arith.constant 0 : index
    %c0_43 = arith.constant 0 : index
    %39 = vector.load %arg3[%c6, %c0_42, %c0_43] : memref<9x4x128xbf16, #tpu.memory_space<vmem>>, vector<1x4x128xbf16>
    %40 = vector.shape_cast %39 : vector<1x4x128xbf16> to vector<4x128xbf16>
    %cst_44 = arith.constant dense<0.000000e+00> : vector<144x128xf32>
    %41 = tpu.matmul %38, %40, %cst_44 {dimension_numbers = #tpu.dot_dimension_numbers<[1], [0], [0], [1], [0, 0, 1, 1], [], []>} : vector<144x4xbf16>, vector<4x128xbf16>, vector<144x128xf32> -> vector<144x128xf32>
    %42 = arith.addf %36, %41 : vector<144x128xf32>
    %c0_45 = arith.constant 0 : index
    %c0_46 = arith.constant 0 : index
    %c37 = arith.constant 37 : index
    %c0_47 = arith.constant 0 : index
    %43 = vector.load %arg2[%c0_45, %c0_46, %c37, %c0_47] : memref<1x1x184x4xbf16, #tpu.memory_space<vmem>>, vector<1x1x144x4xbf16>
    %44 = vector.shape_cast %43 : vector<1x1x144x4xbf16> to vector<144x4xbf16>
    %c7 = arith.constant 7 : index
    %c0_48 = arith.constant 0 : index
    %c0_49 = arith.constant 0 : index
    %45 = vector.load %arg3[%c7, %c0_48, %c0_49] : memref<9x4x128xbf16, #tpu.memory_space<vmem>>, vector<1x4x128xbf16>
    %46 = vector.shape_cast %45 : vector<1x4x128xbf16> to vector<4x128xbf16>
    %cst_50 = arith.constant dense<0.000000e+00> : vector<144x128xf32>
    %47 = tpu.matmul %44, %46, %cst_50 {dimension_numbers = #tpu.dot_dimension_numbers<[1], [0], [0], [1], [0, 0, 1, 1], [], []>} : vector<144x4xbf16>, vector<4x128xbf16>, vector<144x128xf32> -> vector<144x128xf32>
    %48 = arith.addf %42, %47 : vector<144x128xf32>
    %c0_51 = arith.constant 0 : index
    %c0_52 = arith.constant 0 : index
    %c38 = arith.constant 38 : index
    %c0_53 = arith.constant 0 : index
    %49 = vector.load %arg2[%c0_51, %c0_52, %c38, %c0_53] : memref<1x1x184x4xbf16, #tpu.memory_space<vmem>>, vector<1x1x144x4xbf16>
    %50 = vector.shape_cast %49 : vector<1x1x144x4xbf16> to vector<144x4xbf16>
    %c8 = arith.constant 8 : index
    %c0_54 = arith.constant 0 : index
    %c0_55 = arith.constant 0 : index
    %51 = vector.load %arg3[%c8, %c0_54, %c0_55] : memref<9x4x128xbf16, #tpu.memory_space<vmem>>, vector<1x4x128xbf16>
    %52 = vector.shape_cast %51 : vector<1x4x128xbf16> to vector<4x128xbf16>
    %cst_56 = arith.constant dense<0.000000e+00> : vector<144x128xf32>
    %53 = tpu.matmul %50, %52, %cst_56 {dimension_numbers = #tpu.dot_dimension_numbers<[1], [0], [0], [1], [0, 0, 1, 1], [], []>} : vector<144x4xbf16>, vector<4x128xbf16>, vector<144x128xf32> -> vector<144x128xf32>
    %54 = arith.addf %48, %53 : vector<144x128xf32>
    %c0_57 = arith.constant 0 : index
    %c0_58 = arith.constant 0 : index
    %55 = vector.load %arg4[%c0_57, %c0_58] : memref<1x128xf32, #tpu.memory_space<vmem>>, vector<1x128xf32>
    %56 = vector.broadcast %55 : vector<1x128xf32> to vector<144x128xf32>
    %57 = arith.addf %54, %56 : vector<144x128xf32>
    %cst_59 = arith.constant 0.000000e+00 : f32
    %58 = vector.broadcast %cst_59 : f32 to vector<144x128xf32>
    %59 = arith.maximumf %57, %58 : vector<144x128xf32>
    %cst_60 = arith.constant 6.000000e+00 : f32
    %60 = vector.broadcast %cst_60 : f32 to vector<144x128xf32>
    %61 = arith.minimumf %59, %60 : vector<144x128xf32>
    %c0_61 = arith.constant 0 : index
    %c0_62 = arith.constant 0 : index
    %62 = vector.load %arg5[%c0_61, %c0_62] : memref<1x128xf32, #tpu.memory_space<vmem>>, vector<1x128xf32>
    %63 = vector.broadcast %62 : vector<1x128xf32> to vector<144x128xf32>
    %64 = arith.mulf %61, %63 : vector<144x128xf32>
    %c0_63 = arith.constant 0 : index
    %c0_64 = arith.constant 0 : index
    %65 = vector.load %arg6[%c0_63, %c0_64] : memref<1x128xf32, #tpu.memory_space<vmem>>, vector<1x128xf32>
    %66 = vector.broadcast %65 : vector<1x128xf32> to vector<144x128xf32>
    %67 = arith.addf %64, %66 : vector<144x128xf32>
    %cst_65 = arith.constant 0.000000e+00 : f32
    %68 = vector.broadcast %cst_65 : f32 to vector<144x128xf32>
    %69 = arith.maximumf %67, %68 : vector<144x128xf32>
    %cst_66 = arith.constant 6.000000e+00 : f32
    %70 = vector.broadcast %cst_66 : f32 to vector<144x128xf32>
    %71 = arith.minimumf %69, %70 : vector<144x128xf32>
    %72 = arith.truncf %71 : vector<144x128xf32> to vector<144x128xbf16>
    %c0_67 = arith.constant 0 : index
    %c0_68 = arith.constant 0 : index
    %73 = vector.load %arg7[%c0_67, %c0_68] : memref<128x128xbf16, #tpu.memory_space<vmem>>, vector<128x128xbf16>
    %cst_69 = arith.constant dense<0.000000e+00> : vector<144x128xf32>
    %74 = tpu.matmul %72, %73, %cst_69 {dimension_numbers = #tpu.dot_dimension_numbers<[1], [0], [0], [1], [0, 0, 1, 1], [], []>} : vector<144x128xbf16>, vector<128x128xbf16>, vector<144x128xf32> -> vector<144x128xf32>
    %c0_70 = arith.constant 0 : index
    %c0_71 = arith.constant 0 : index
    %75 = vector.load %arg8[%c0_70, %c0_71] : memref<1x128xf32, #tpu.memory_space<vmem>>, vector<1x128xf32>
    %76 = vector.broadcast %75 : vector<1x128xf32> to vector<144x128xf32>
    %77 = arith.addf %74, %76 : vector<144x128xf32>
    %c0_72 = arith.constant 0 : index
    %c0_73 = arith.constant 0 : index
    %c19_74 = arith.constant 19 : index
    %c0_75 = arith.constant 0 : index
    %78 = vector.load %arg2[%c0_72, %c0_73, %c19_74, %c0_75] : memref<1x1x184x4xbf16, #tpu.memory_space<vmem>>, vector<1x1x144x4xbf16>
    %79 = vector.shape_cast %78 : vector<1x1x144x4xbf16> to vector<144x4xbf16>
    %80 = arith.extf %79 : vector<144x4xbf16> to vector<144x4xf32>
    %cst_76 = arith.constant 0.000000e+00 : f32
    %81 = vector.broadcast %cst_76 : f32 to vector<144x124xf32>
    %82 = tpu.concatenate %80, %81 in 1 : vector<144x4xf32>, vector<144x124xf32> -> vector<144x128xf32>
    %83 = arith.addf %77, %82 : vector<144x128xf32>
    %c0_77 = arith.constant 0 : index
    %c0_78 = arith.constant 0 : index
    %c0_79 = arith.constant 0 : index
    %c0_80 = arith.constant 0 : index
    %84 = vector.load %arg9[%c0_77, %c0_78, %c0_79, %c0_80] : memref<1x1x144x128xf32, #tpu.memory_space<vmem>>, vector<1x1x144x128xf32>
    %85 = vector.shape_cast %84 : vector<1x1x144x128xf32> to vector<144x128xf32>
    %86 = vector.shape_cast %83 : vector<144x128xf32> to vector<1x1x144x128xf32>
    tpu.vector_store %arg9[%c0_77, %c0_78, %c0_79, %c0_80], %86 {strides = array<i32>} : memref<1x1x144x128xf32, #tpu.memory_space<vmem>>, vector<1x1x144x128xf32>,
    return
  }
  func.func @transform_0(%arg0: i32, %arg1: i32) -> (i32, i32, i32, i32) {
    %c0_i32 = arith.constant 0 : i32
    %c0_i32_0 = arith.constant 0 : i32
    %c0_i32_1 = arith.constant 0 : i32
    return %arg0, %arg1, %c0_i32, %c0_i32_0 : i32, i32, i32, i32
  }
  func.func @transform_1(%arg0: i32, %arg1: i32) -> (i32, i32, i32) {
    %c0_i32 = arith.constant 0 : i32
    %c0_i32_0 = arith.constant 0 : i32
    %c0_i32_1 = arith.constant 0 : i32
    %c0_i32_2 = arith.constant 0 : i32
    return %c0_i32, %c0_i32_0, %c0_i32_1 : i32, i32, i32
  }
  func.func @transform_2(%arg0: i32, %arg1: i32) -> (i32, i32) {
    %c0_i32 = arith.constant 0 : i32
    %c0_i32_0 = arith.constant 0 : i32
    %c0_i32_1 = arith.constant 0 : i32
    return %c0_i32, %c0_i32_0 : i32, i32
  }
  func.func @transform_3(%arg0: i32, %arg1: i32) -> (i32, i32) {
    %c0_i32 = arith.constant 0 : i32
    %c0_i32_0 = arith.constant 0 : i32
    %c0_i32_1 = arith.constant 0 : i32
    return %c0_i32, %c0_i32_0 : i32, i32
  }
  func.func @transform_4(%arg0: i32, %arg1: i32) -> (i32, i32) {
    %c0_i32 = arith.constant 0 : i32
    %c0_i32_0 = arith.constant 0 : i32
    %c0_i32_1 = arith.constant 0 : i32
    return %c0_i32, %c0_i32_0 : i32, i32
  }
  func.func @transform_5(%arg0: i32, %arg1: i32) -> (i32, i32) {
    %c0_i32 = arith.constant 0 : i32
    %c0_i32_0 = arith.constant 0 : i32
    %c0_i32_1 = arith.constant 0 : i32
    return %c0_i32, %c0_i32_0 : i32, i32
  }
  func.func @transform_6(%arg0: i32, %arg1: i32) -> (i32, i32) {
    %c0_i32 = arith.constant 0 : i32
    %c0_i32_0 = arith.constant 0 : i32
    %c0_i32_1 = arith.constant 0 : i32
    return %c0_i32, %c0_i32_0 : i32, i32
  }
  func.func @transform_7(%arg0: i32, %arg1: i32) -> (i32, i32, i32, i32) {
    %c0_i32 = arith.constant 0 : i32
    %c0_i32_0 = arith.constant 0 : i32
    %c0_i32_1 = arith.constant 0 : i32
    return %arg0, %arg1, %c0_i32, %c0_i32_0 : i32, i32, i32, i32
  }
}

</mosaic_0001>

<llo_original>
// kernel: tpu_custom_call.1
$region0: #{tpu_custom_call.1}
  #allocation0 [shape = 'u32[]', space=smem, size = 0x4, offset = 0x4, fixed_abs, tag = 'smem constant byte address 0x4 - core index']
  #allocation1 [shape = 'u32[144,128]{1,0:T(1,128)}', space=vmem, size = 0x12000, scoped, tag = 'internal scratch']
  %s0 = inlined_call_operand.vmem [shape: bf16[2,2,184,4], index: 0, kind: input, shape index: {}]
  %s1 = inlined_call_operand.vmem [shape: bf16[9,4,128], index: 1, kind: input, shape index: {}]
  %s2 = inlined_call_operand.vmem [shape: f32[1,128], index: 2, kind: input, shape index: {}]
  %s3 = inlined_call_operand.vmem [shape: f32[1,128], index: 3, kind: input, shape index: {}]
  %s4 = inlined_call_operand.vmem [shape: f32[1,128], index: 4, kind: input, shape index: {}]
  %s5 = inlined_call_operand.vmem [shape: bf16[128,128], index: 5, kind: input, shape index: {}]
  %s6 = inlined_call_operand.vmem [shape: f32[1,128], index: 6, kind: input, shape index: {}]
  %s7 = inlined_call_operand.hbm [shape: f32[2,2,144,128], index: 7, kind: output, shape index: {}]
  %s8 = sld [smem:[#allocation0]]
  $region61: #{tpu_custom_call.1} parent=0
    _
  %s10 = ssub.s32 1, %s8
  %s11 = scalar_select 0, %s10, %s8
  $region1: #{tpu_custom_call.1} parent=0
    #allocation2 [shape = 'u8[147456]{0}', space=vmem, size = 0x24000, scoped, tag = 'output window, operand 0']
    #allocation3 [shape = 's32[2]{0}', space=sflag, size = 0x8, scoped, tag = 'scoped memory for tpu_custom_call.1']
    %12 = vsyncpa [#allocation3], 0
    %s13 = scalar_lea.sflag [#allocation3], 1
    %14 = vsyncpa %s13, 0
    loop: start=0, step=1, limit=6
    $region2: #{tpu_custom_call.1} parent=1 // loop_pre_header
      _
    $region3: #{tpu_custom_call.1} parent=1 // loop_header
      %s16 = sphi 0, %s20
      %p17 = scmp.ge.s32.totalorder %s16, 6
      %s23 = sphi 0, %s35
      %s24 = sphi 0, %s31
      %s25 = sphi 0, %s23
      %s26 = sphi 0, %s24
      %s27 = sphi 0, %s25
      %s28 = sphi 0, %s26
      %s40 = sphi 0, %s42
      %s43 = sphi 0, %s40
      %s44 = sphi 0, %s43
      %s60 = sphi 0, %s44
      %s64 = sphi 0, %s64
      %s66 = sphi 0, %s64
      %s67 = sphi 0, %s66
      %s81 = sphi 0, %s67
      %s85 = sphi 0, %s85
      %s87 = sphi 0, %s85
      %s88 = sphi 0, %s87
      %s102 = sphi 0, %s88
      %s106 = sphi 0, %s106
      %s108 = sphi 0, %s106
      %s109 = sphi 0, %s108
      %s123 = sphi 0, %s109
      %s127 = sphi 0, %s127
      %s129 = sphi 0, %s127
      %s130 = sphi 0, %s129
      %s144 = sphi 0, %s130
      %s148 = sphi 0, %s148
      %s150 = sphi 0, %s148
      %s151 = sphi 0, %s150
      %s165 = sphi 0, %s151
      %s169 = sphi 0, %s169
      %s171 = sphi 0, %s169
      %s172 = sphi 0, %s171
      %s186 = sphi 0, %s172
      %s194 = sphi 0, %s196
      %s197 = sphi 0, %s194
      %s198 = sphi 0, %s197
      %s214 = sphi 0, %s198
    $region4: #{tpu_custom_call.1} parent=1 // loop_header_branch
      %19 = sbr.rel (%p17) target = $region8
    $region5: #{tpu_custom_call.1} parent=1 // loop_body
      %s21 = ssub.s32 %s16, 1
      %s22 = ssub.s32 %s16, 2
      %s29 = sadd.s32 1, %s24
      %p30 = scmp.ge.s32.totalorder %s29, 2
      %s31 = scalar_select %p30, 0, %s29
      %s32 = sadd.s32 1, %s23
      %s33 = scalar_select %p30, %s32, %s23
      %p34 = scmp.ge.s32.totalorder %s33, 2
      %s35 = scalar_select %p34, 0, %s33
      %s36 = ssub.s32 %s23, %s35
      %s37 = ssub.s32 %s24, %s31
      %s38 = sor.u32 %s36, %s37
      %p39 = scmp.eq.s32.totalorder %s38, 0
      %s41 = sadd.s32 %s40, 1
      %s42 = scalar_select %p39, %s40, %s41
      %p45 = pneg %p39
      %p46 = scmp.eq.s32.totalorder %s16, 3
      %p47 = por %p45, %p46
      %p48 = scmp.ne.s32.totalorder %s40, %s43
      %p49 = scmp.eq.s32.totalorder %s16, 0
      %p50 = por %p48, %p49
      %p51 = scmp.ne.s32.totalorder %s40, %s43
      %p52 = scmp.eq.s32.totalorder %s21, 3
      %p53 = por %p51, %p52
      %p54 = scmp.ne.s32.totalorder %s43, %s44
      %p55 = scmp.eq.s32.totalorder %s21, 0
      %p56 = por %p54, %p55
      %p57 = scmp.ne.s32.totalorder %s43, %s44
      %p58 = scmp.eq.s32.totalorder %s22, 3
      %p59 = por %p57, %p58
      %p61 = scmp.ne.s32.totalorder %s44, %s60
      %p62 = scmp.eq.s32.totalorder %s22, 0
      %p63 = por %p61, %p62
      %s65 = sadd.s32 %s64, 1
      %p68 = scmp.eq.s32.totalorder %s16, 3
      %p69 = scmp.ne.s32.totalorder %s64, %s66
      %p70 = scmp.eq.s32.totalorder %s16, 0
      %p71 = por %p69, %p70
      %p72 = scmp.ne.s32.totalorder %s64, %s66
      %p73 = scmp.eq.s32.totalorder %s21, 3
      %p74 = por %p72, %p73
      %p75 = scmp.ne.s32.totalorder %s66, %s67
      %p76 = scmp.eq.s32.totalorder %s21, 0
      %p77 = por %p75, %p76
      %p78 = scmp.ne.s32.totalorder %s66, %s67
      %p79 = scmp.eq.s32.totalorder %s22, 3
      %p80 = por %p78, %p79
      %p82 = scmp.ne.s32.totalorder %s67, %s81
      %p83 = scmp.eq.s32.totalorder %s22, 0
      %p84 = por %p82, %p83
      %s86 = sadd.s32 %s85, 1
      %p89 = scmp.eq.s32.totalorder %s16, 3
      %p90 = scmp.ne.s32.totalorder %s85, %s87
      %p91 = scmp.eq.s32.totalorder %s16, 0
      %p92 = por %p90, %p91
      %p93 = scmp.ne.s32.totalorder %s85, %s87
      %p94 = scmp.eq.s32.totalorder %s21, 3
      %p95 = por %p93, %p94
      %p96 = scmp.ne.s32.totalorder %s87, %s88
      %p97 = scmp.eq.s32.totalorder %s21, 0
      %p98 = por %p96, %p97
      %p99 = scmp.ne.s32.totalorder %s87, %s88
      %p100 = scmp.eq.s32.totalorder %s22, 3
      %p101 = por %p99, %p100
      %p103 = scmp.ne.s32.totalorder %s88, %s102
      %p104 = scmp.eq.s32.totalorder %s22, 0
      %p105 = por %p103, %p104
      %s107 = sadd.s32 %s106, 1
      %p110 = scmp.eq.s32.totalorder %s16, 3
      %p111 = scmp.ne.s32.totalorder %s106, %s108
      %p112 = scmp.eq.s32.totalorder %s16, 0
      %p113 = por %p111, %p112
      %p114 = scmp.ne.s32.totalorder %s106, %s108
      %p115 = scmp.eq.s32.totalorder %s21, 3
      %p116 = por %p114, %p115
      %p117 = scmp.ne.s32.totalorder %s108, %s109
      %p118 = scmp.eq.s32.totalorder %s21, 0
      %p119 = por %p117, %p118
      %p120 = scmp.ne.s32.totalorder %s108, %s109
      %p121 = scmp.eq.s32.totalorder %s22, 3
      %p122 = por %p120, %p121
      %p124 = scmp.ne.s32.totalorder %s109, %s123
      %p125 = scmp.eq.s32.totalorder %s22, 0
      %p126 = por %p124, %p125
      %s128 = sadd.s32 %s127, 1
      %p131 = scmp.eq.s32.totalorder %s16, 3
      %p132 = scmp.ne.s32.totalorder %s127, %s129
      %p133 = scmp.eq.s32.totalorder %s16, 0
      %p134 = por %p132, %p133
      %p135 = scmp.ne.s32.totalorder %s127, %s129
      %p136 = scmp.eq.s32.totalorder %s21, 3
      %p137 = por %p135, %p136
      %p138 = scmp.ne.s32.totalorder %s129, %s130
      %p139 = scmp.eq.s32.totalorder %s21, 0
      %p140 = por %p138, %p139
      %p141 = scmp.ne.s32.totalorder %s129, %s130
      %p142 = scmp.eq.s32.totalorder %s22, 3
      %p143 = por %p141, %p142
      %p145 = scmp.ne.s32.totalorder %s130, %s144
      %p146 = scmp.eq.s32.totalorder %s22, 0
      %p147 = por %p145, %p146
      %s149 = sadd.s32 %s148, 1
      %p152 = scmp.eq.s32.totalorder %s16, 3
      %p153 = scmp.ne.s32.totalorder %s148, %s150
      %p154 = scmp.eq.s32.totalorder %s16, 0
      %p155 = por %p153, %p154
      %p156 = scmp.ne.s32.totalorder %s148, %s150
      %p157 = scmp.eq.s32.totalorder %s21, 3
      %p158 = por %p156, %p157
      %p159 = scmp.ne.s32.totalorder %s150, %s151
      %p160 = scmp.eq.s32.totalorder %s21, 0
      %p161 = por %p159, %p160
      %p162 = scmp.ne.s32.totalorder %s150, %s151
      %p163 = scmp.eq.s32.totalorder %s22, 3
      %p164 = por %p162, %p163
      %p166 = scmp.ne.s32.totalorder %s151, %s165
      %p167 = scmp.eq.s32.totalorder %s22, 0
      %p168 = por %p166, %p167
      %s170 = sadd.s32 %s169, 1
      %p173 = scmp.eq.s32.totalorder %s16, 3
      %p174 = scmp.ne.s32.totalorder %s169, %s171
      %p175 = scmp.eq.s32.totalorder %s16, 0
      %p176 = por %p174, %p175
      %p177 = scmp.ne.s32.totalorder %s169, %s171
      %p178 = scmp.eq.s32.totalorder %s21, 3
      %p179 = por %p177, %p178
      %p180 = scmp.ne.s32.totalorder %s171, %s172
      %p181 = scmp.eq.s32.totalorder %s21, 0
      %p182 = por %p180, %p181
      %p183 = scmp.ne.s32.totalorder %s171, %s172
      %p184 = scmp.eq.s32.totalorder %s22, 3
      %p185 = por %p183, %p184
      %p187 = scmp.ne.s32.totalorder %s172, %s186
      %p188 = scmp.eq.s32.totalorder %s22, 0
      %p189 = por %p187, %p188
      %s190 = ssub.s32 %s23, %s35
      %s191 = ssub.s32 %s24, %s31
      %s192 = sor.u32 %s190, %s191
      %p193 = scmp.eq.s32.totalorder %s192, 0
      %s195 = sadd.s32 %s194, 1
      %s196 = scalar_select %p193, %s194, %s195
      %p199 = pneg %p193
      %p200 = scmp.eq.s32.totalorder %s16, 3
      %p201 = por %p199, %p200
      %p202 = scmp.ne.s32.totalorder %s194, %s197
      %p203 = scmp.eq.s32.totalorder %s16, 0
      %p204 = por %p202, %p203
      %p205 = scmp.ne.s32.totalorder %s194, %s197
      %p206 = scmp.eq.s32.totalorder %s21, 3
      %p207 = por %p205, %p206
      %p208 = scmp.ne.s32.totalorder %s197, %s198
      %p209 = scmp.eq.s32.totalorder %s21, 0
      %p210 = por %p208, %p209
      %p211 = scmp.ne.s32.totalorder %s197, %s198
      %p212 = scmp.eq.s32.totalorder %s22, 3
      %p213 = por %p211, %p212
      %p215 = scmp.ne.s32.totalorder %s198, %s214
      %p216 = scmp.eq.s32.totalorder %s22, 0
      %p217 = por %p215, %p216
      %p218 = scmp.le.s32.totalorder 1, %s16
      %p219 = scmp.lt.s32.totalorder %s16, 5
      %p220 = pnand %p218, %p219
      %p221 = pneg %p220
      // Predicated region
      $region9: #{tpu_custom_call.1} parent=5 // pred_check
        _
      $region10: #{tpu_custom_call.1} parent=5 // pred_check_branch
        %223 = sbr.rel (%p220) target = $region12
      $region11: #{tpu_custom_call.1} parent=5 // pred_region
        %s224 = ssub.s32 %s16, 1
        // Predicated region
        $region13: #{tpu_custom_call.1} parent=11 // pred_check
          %p225 = pneg %p77
        $region14: #{tpu_custom_call.1} parent=11 // pred_check_branch
          %227 = sbr.rel (%p225) target = $region16
        $region15: #{tpu_custom_call.1} parent=11 // pred_region
          _
        $region16: #{tpu_custom_call.1} parent=11 // pred_fallthru
          _
        // Predicated region
        $region17: #{tpu_custom_call.1} parent=11 // pred_check
          %p228 = pneg %p98
        $region18: #{tpu_custom_call.1} parent=11 // pred_check_branch
          %230 = sbr.rel (%p228) target = $region20
        $region19: #{tpu_custom_call.1} parent=11 // pred_region
          _
        $region20: #{tpu_custom_call.1} parent=11 // pred_fallthru
          _
        // Predicated region
        $region21: #{tpu_custom_call.1} parent=11 // pred_check
          %p231 = pneg %p119
        $region22: #{tpu_custom_call.1} parent=11 // pred_check_branch
          %233 = sbr.rel (%p231) target = $region24
        $region23: #{tpu_custom_call.1} parent=11 // pred_region
          _
        $region24: #{tpu_custom_call.1} parent=11 // pred_fallthru
          _
        // Predicated region
        $region25: #{tpu_custom_call.1} parent=11 // pred_check
          %p234 = pneg %p140
        $region26: #{tpu_custom_call.1} parent=11 // pred_check_branch
          %236 = sbr.rel (%p234) target = $region28
        $region27: #{tpu_custom_call.1} parent=11 // pred_region
          _
        $region28: #{tpu_custom_call.1} parent=11 // pred_fallthru
          _
        // Predicated region
        $region29: #{tpu_custom_call.1} parent=11 // pred_check
          %p237 = pneg %p161
        $region30: #{tpu_custom_call.1} parent=11 // pred_check_branch
          %239 = sbr.rel (%p237) target = $region32
        $region31: #{tpu_custom_call.1} parent=11 // pred_region
          _
        $region32: #{tpu_custom_call.1} parent=11 // pred_fallthru
          _
        // Predicated region
        $region33: #{tpu_custom_call.1} parent=11 // pred_check
          %p240 = pneg %p182
        $region34: #{tpu_custom_call.1} parent=11 // pred_check_branch
          %242 = sbr.rel (%p240) target = $region36
        $region35: #{tpu_custom_call.1} parent=11 // pred_region
          _
        $region36: #{tpu_custom_call.1} parent=11 // pred_fallthru
          _
      $region12: #{tpu_custom_call.1} parent=5 // pred_fallthru
        _
      %p243 = scmp.lt.s32.totalorder %s16, 4
      // Predicated region
      $region37: #{tpu_custom_call.1} parent=5 // pred_check
        %p244 = pneg %p243
      $region38: #{tpu_custom_call.1} parent=5 // pred_check_branch
        %246 = sbr.rel (%p244) target = $region40
      $region39: #{tpu_custom_call.1} parent=5 // pred_region
        // Predicated region
        $region41: #{tpu_custom_call.1} parent=39 // pred_check
          %p247 = pneg %p50
        $region42: #{tpu_custom_call.1} parent=39 // pred_check_branch
          %249 = sbr.rel (%p247) target = $region44
        $region43: #{tpu_custom_call.1} parent=39 // pred_region
          %p250 = scmp.lt.s32.totalorder %s23, 1
          %s251 = scalar_select %p250, %s23, 1
          %p252 = scmp.lt.s32.totalorder %s24, 1
          %s253 = scalar_select %p252, %s24, 1
          %s254 = smul.addr %s253, 23
          %s255 = smul.addr %s251, 46
          %s256 = sadd.s32 %s254, %s255
          %s257 = smul.addr %s256, 4
          %s258 = scalar_lea.vmem %s0, %s257
        $region44: #{tpu_custom_call.1} parent=39 // pred_fallthru
          _
      $region40: #{tpu_custom_call.1} parent=5 // pred_fallthru
        _
      %p259 = scmp.le.s32.totalorder 1, %s16
      %p260 = scmp.lt.s32.totalorder %s16, 5
      %p261 = pnand %p259, %p260
      %p262 = pneg %p261
      // Predicated region
      $region45: #{tpu_custom_call.1} parent=5 // pred_check
        _
      $region46: #{tpu_custom_call.1} parent=5 // pred_check_branch
        %264 = sbr.rel (%p261) target = $region48
      $region47: #{tpu_custom_call.1} parent=5 // pred_region
        %s265 = ssub.s32 %s16, 1
        %p266 = scmp.lt.s32.totalorder %s25, 1
        %s267 = scalar_select %p266, %s25, 1
        %p268 = scmp.lt.s32.totalorder %s26, 1
        %s269 = scalar_select %p268, %s26, 1
        %s270 = smul.addr %s269, 23
        %s271 = smul.addr %s267, 46
        %s272 = sadd.s32 %s270, %s271
        %s273 = smul.addr %s272, 4
        %s274 = scalar_lea.vmem %s0, %s273
        %p275 = pneg %p56
        %p276 = pneg %p53
        %p277 = pneg %p77
        %p278 = pneg %p74
        %p279 = pneg %p98
        %p280 = pneg %p95
        %p281 = pneg %p119
        %p282 = pneg %p116
        %p283 = pneg %p140
        %p284 = pneg %p137
        %p285 = pneg %p161
        %p286 = pneg %p158
        %p287 = pneg %p182
        %p288 = pneg %p179
        %p289 = pneg %p210
        %p290 = pneg %p207
        %s291 = sand.u32 %s197, 1
        %s292 = scalar_lea.sflag [#allocation3], %s291
        %s293 = sand.u32 %s197, 1
        %s294 = smul.addr %s293, 144
        %s295 = scalar_lea.vmem [#allocation2], %s294
        %p296 = scmp.lt.s32.totalorder %s25, 1
        %s297 = scalar_select %p296, %s25, 1
        %p298 = scmp.lt.s32.totalorder %s26, 1
        %s299 = scalar_select %p298, %s26, 1
        %s300 = smul.addr %s299, 23
        %s301 = smul.addr %s297, 46
        %s302 = sadd.s32 %s300, %s301
        %s303 = smul.addr %s302, 4
        %s304 = scalar_lea.vmem %s0, %s303
        %v306 = vld [vmem:[%s304] sm:$0xf]
        %v307 = vld [vmem:[%s304 + $0x4] sm:$0xf]
        %v308 = vld [vmem:[%s304 + $0x8] sm:$0xf]
        %v309 = vld [vmem:[%s304 + $0xc] sm:$0xf]
        %v310 = vld [vmem:[%s304 + $0x10] sm:$0xf]
        %v311 = vld [vmem:[%s304 + $0x14] sm:$0xf]
        %v312 = vld [vmem:[%s304 + $0x18] sm:$0xf]
        %v313 = vld [vmem:[%s304 + $0x1c] sm:$0xf]
        %v314 = vld [vmem:[%s304 + $0x20] sm:$0xf]
        %v315 = vld [vmem:[%s304 + $0x24] sm:$0xf]
        %v316 = vld [vmem:[%s304 + $0x28] sm:$0xf]
        %v317 = vld [vmem:[%s304 + $0x2c] sm:$0xf]
        %v318 = vld [vmem:[%s304 + $0x30] sm:$0xf]
        %v319 = vld [vmem:[%s304 + $0x34] sm:$0xf]
        %v320 = vld [vmem:[%s304 + $0x38] sm:$0xf]
        %v321 = vld [vmem:[%s304 + $0x3c] sm:$0xf]
        %v322 = vld [vmem:[%s304 + $0x40] sm:$0xf]
        %v323 = vld [vmem:[%s304 + $0x44] sm:$0xf]
        %v324 = vld [vmem:[%s1] sm:$0x3]
        %v325 = vld [vmem:[%s304 + $0x48] sm:$0x1]
        %s326 = scalar_lea.vmem %s1, 2
        %v327 = vld [vmem:[%s326] sm:$0x3]
        %v347 = vunpack.c.l.b16 %v306
        %v348 = vunpack.c.l.b16 %v307
        %v349 = vunpack.c.l.b16 %v308
        %v350 = vunpack.c.l.b16 %v309
        %v351 = vunpack.c.l.b16 %v310
        %v352 = vunpack.c.l.b16 %v311
        %v353 = vunpack.c.l.b16 %v312
        %v354 = vunpack.c.l.b16 %v313
        %v355 = vunpack.c.l.b16 %v314
        %v356 = vunpack.c.l.b16 %v315
        %v357 = vunpack.c.l.b16 %v316
        %v358 = vunpack.c.l.b16 %v317
        %v359 = vunpack.c.l.b16 %v318
        %v360 = vunpack.c.l.b16 %v319
        %v361 = vunpack.c.l.b16 %v320
        %v362 = vunpack.c.l.b16 %v321
        %v363 = vunpack.c.l.b16 %v322
        %v364 = vunpack.c.l.b16 %v323
        %v365 = vunpack.c.l.b16 %v325
        %v366 = vpack.c.b16 %v348, %v347
        %v367 = vpack.c.b16 %v350, %v349
        %v368 = vpack.c.b16 %v352, %v351
        %v369 = vpack.c.b16 %v354, %v353
        %v370 = vpack.c.b16 %v356, %v355
        %v371 = vpack.c.b16 %v358, %v357
        %v372 = vpack.c.b16 %v360, %v359
        %v373 = vpack.c.b16 %v362, %v361
        %v374 = vpack.c.b16 %v364, %v363
        %v375 = vpack.c.b16 %v365, %v365
        %vm376 = vsmask.f32 7424
        %v378 = vshrl.u32 %v366, 16
        %v380 = vshll.u32 %v366, 16
        %v382 = vrot.slane %v380, 1
        %v383 = vor.u32 %v378, %v382
        %v385 = vshll.u32 %v367, 16
        %v387 = vrot.slane %v385, 1
        %v388 = vsel %vm376, %v383, %v387
        %v389 = vshrl.u32 %v367, 16
        %v391 = vor.u32 %v389, %v387
        %v393 = vshll.u32 %v368, 16
        %v395 = vrot.slane %v393, 1
        %v396 = vsel %vm376, %v391, %v395
        %v397 = vshrl.u32 %v368, 16
        %v399 = vor.u32 %v397, %v395
        %v401 = vshll.u32 %v369, 16
        %v403 = vrot.slane %v401, 1
        %v404 = vsel %vm376, %v399, %v403
        %v405 = vshrl.u32 %v369, 16
        %v407 = vor.u32 %v405, %v403
        %v409 = vshll.u32 %v370, 16
        %v411 = vrot.slane %v409, 1
        %v412 = vsel %vm376, %v407, %v411
        %v413 = vshrl.u32 %v370, 16
        %v415 = vor.u32 %v413, %v411
        %v417 = vshll.u32 %v371, 16
        %v419 = vrot.slane %v417, 1
        %v420 = vsel %vm376, %v415, %v419
        %v421 = vshrl.u32 %v371, 16
        %v423 = vor.u32 %v421, %v419
        %v425 = vshll.u32 %v372, 16
        %v427 = vrot.slane %v425, 1
        %v428 = vsel %vm376, %v423, %v427
        %v429 = vshrl.u32 %v372, 16
        %v431 = vor.u32 %v429, %v427
        %v433 = vshll.u32 %v373, 16
        %v435 = vrot.slane %v433, 1
        %v436 = vsel %vm376, %v431, %v435
        %v437 = vshrl.u32 %v373, 16
        %v439 = vor.u32 %v437, %v435
        %v441 = vshll.u32 %v374, 16
        %v443 = vrot.slane %v441, 1
        %v444 = vsel %vm376, %v439, %v443
        %v445 = vshrl.u32 %v374, 16
        %v447 = vor.u32 %v445, %v443
        %v449 = vshll.u32 %v375, 16
        %v451 = vrot.slane %v449, 1
        %v452 = vsel %vm376, %v447, %v451
        %vm453 = vcmask 31744
        %v455 = vsel %vm453, %v388, 0
        %v458 = vsel %vm453, %v396, 0
        %v461 = vsel %vm453, %v404, 0
        %v464 = vsel %vm453, %v412, 0
        %v467 = vsel %vm453, %v420, 0
        %v470 = vsel %vm453, %v428, 0
        %v473 = vsel %vm453, %v436, 0
        %v476 = vsel %vm453, %v444, 0
        %v479 = vsel %vm453, %v452, 0
        %vm481 = vcmask 1041408
        %v483 = vsel %vm481, %v327, 0
        %485 = vmatprep.subr.bf16.mxu0 0
        %486 = vmatpush1.bf16.msra.mxu0 %v483
        %487 = vmatprep.subr.bf16.mxu0 0
        %488 = vmatpush1.bf16.msra.mxu0 0
        %489 = vmatprep.subr.bf16.mxu0 0
        %490 = vmatpush1.bf16.msra.mxu0 0
        %491 = vmatprep.subr.bf16.mxu0 0
        %492 = vmatpush1.bf16.msra.mxu0 0
        %493 = vmatprep.subr.bf16.mxu0 0
        %494 = vmatpush1.bf16.msra.mxu0 0
        %495 = vmatprep.subr.bf16.mxu0 0
        %496 = vmatpush1.bf16.msra.mxu0 0
        %497 = vmatprep.subr.bf16.mxu0 0
        %498 = vmatpush1.bf16.msra.mxu0 0
        %499 = vmatprep.subr.bf16.mxu0 0
        %500 = vmatpush1.bf16.msra.mxu0 0
        %501 = vmatprep.subr.bf16.mxu0 0
        %502 = vmatpush1.bf16.msra.mxu0 0
        %503 = vmatprep.subr.bf16.mxu0 0
        %504 = vmatpush1.bf16.msra.mxu0 0
        %505 = vmatprep.subr.bf16.mxu0 0
        %506 = vmatpush1.bf16.msra.mxu0 0
        %507 = vmatprep.subr.bf16.mxu0 0
        %508 = vmatpush1.bf16.msra.mxu0 0
        %509 = vmatprep.subr.bf16.mxu0 0
        %510 = vmatpush1.bf16.msra.mxu0 0
        %511 = vmatprep.subr.bf16.mxu0 0
        %512 = vmatpush1.bf16.msra.mxu0 0
        %513 = vmatprep.subr.bf16.mxu0 0
        %514 = vmatpush1.bf16.msra.mxu0 0
        %515 = vmatprep.subr.bf16.mxu0 0
        %516 = vmatpush1.bf16.msra.mxu0 0
        %517 = vmatprep.mubr.bf16.mxu0 0
        %518 = vmatmul.mubr.bf16.gmra.mrb[0].mxu0 %v455
        %v519 = vpop.f32.mrb[0].mxu0
        %v520 = vadd.f32 0.0, %v519
        %v521 = vpop.f32.mrb[0].mxu0
        %v522 = vpop.f32.mrb[0].mxu0
        %v523 = vadd.f32 0.0, %v522
        %v524 = vpop.f32.mrb[0].mxu0
        %525 = vmatprep.mubr.bf16.mxu0 0
        %526 = vmatmul.mubr.bf16.gmra.mrb[0].mxu0 %v458
        %v527 = vpop.f32.mrb[0].mxu0
        %v528 = vadd.f32 0.0, %v527
        %v529 = vpop.f32.mrb[0].mxu0
        %v530 = vpop.f32.mrb[0].mxu0
        %v531 = vadd.f32 0.0, %v530
        %v532 = vpop.f32.mrb[0].mxu0
        %533 = vmatprep.mubr.bf16.mxu0 0
        %534 = vmatmul.mubr.bf16.gmra.mrb[0].mxu0 %v461
        %v535 = vpop.f32.mrb[0].mxu0
        %v536 = vadd.f32 0.0, %v535
        %v537 = vpop.f32.mrb[0].mxu0
        %v538 = vpop.f32.mrb[0].mxu0
        %v539 = vadd.f32 0.0, %v538
        %v540 = vpop.f32.mrb[0].mxu0
        %541 = vmatprep.mubr.bf16.mxu0 0
        %542 = vmatmul.mubr.bf16.gmra.mrb[0].mxu0 %v464
        %v543 = vpop.f32.mrb[0].mxu0
        %v544 = vadd.f32 0.0, %v543
        %v545 = vpop.f32.mrb[0].mxu0
        %v546 = vpop.f32.mrb[0].mxu0
        %v547 = vadd.f32 0.0, %v546
        %v548 = vpop.f32.mrb[0].mxu0
        %549 = vmatprep.mubr.bf16.mxu0 0
        %550 = vmatmul.mubr.bf16.gmra.mrb[0].mxu0 %v467
        %v551 = vpop.f32.mrb[0].mxu0
        %v552 = vadd.f32 0.0, %v551
        %v553 = vpop.f32.mrb[0].mxu0
        %v554 = vpop.f32.mrb[0].mxu0
        %v555 = vadd.f32 0.0, %v554
        %v556 = vpop.f32.mrb[0].mxu0
        %557 = vmatprep.mubr.bf16.mxu0 0
        %558 = vmatmul.mubr.bf16.gmra.mrb[0].mxu0 %v470
        %v559 = vpop.f32.mrb[0].mxu0
        %v560 = vadd.f32 0.0, %v559
        %v561 = vpop.f32.mrb[0].mxu0
        %v562 = vpop.f32.mrb[0].mxu0
        %v563 = vadd.f32 0.0, %v562
        %v564 = vpop.f32.mrb[0].mxu0
        %565 = vmatprep.mubr.bf16.mxu0 0
        %566 = vmatmul.mubr.bf16.gmra.mrb[0].mxu0 %v473
        %v567 = vpop.f32.mrb[0].mxu0
        %v568 = vadd.f32 0.0, %v567
        %v569 = vpop.f32.mrb[0].mxu0
        %v570 = vpop.f32.mrb[0].mxu0
        %v571 = vadd.f32 0.0, %v570
        %v572 = vpop.f32.mrb[0].mxu0
        %573 = vmatprep.mubr.bf16.mxu0 0
        %574 = vmatmul.mubr.bf16.gmra.mrb[0].mxu0 %v476
        %v575 = vpop.f32.mrb[0].mxu0
        %v576 = vadd.f32 0.0, %v575
        %v577 = vpop.f32.mrb[0].mxu0
        %v578 = vpop.f32.mrb[0].mxu0
        %v579 = vadd.f32 0.0, %v578
        %v580 = vpop.f32.mrb[0].mxu0
        %581 = vmatprep.mubr.bf16.mxu0 0
        %582 = vmatmul.mubr.bf16.gmra.mrb[0].mxu0 %v479
        %v583 = vpop.f32.mrb[0].mxu0
        %v584 = vadd.f32 0.0, %v583
        %v585 = vpop.f32.mrb[0].mxu0
        %v586 = vpop.f32.mrb[0].mxu0
        %v587 = vadd.f32 0.0, %v586
        %v588 = vpop.f32.mrb[0].mxu0
        %589 = vdwg.mxu0
        %v590 = vsel %vm453, %v366, 0
        %v592 = vsel %vm453, %v367, 0
        %v594 = vsel %vm453, %v368, 0
        %v596 = vsel %vm453, %v369, 0
        %v598 = vsel %vm453, %v370, 0
        %v600 = vsel %vm453, %v371, 0
        %v602 = vsel %vm453, %v372, 0
        %v604 = vsel %vm453, %v373, 0
        %v606 = vsel %vm453, %v374, 0
        %v609 = vsel %vm481, %v324, 0
        %611 = vmatprep.subr.bf16.mxu0 0
        %612 = vmatpush1.bf16.msra.mxu0 %v609
        %613 = vmatprep.subr.bf16.mxu0 0
        %614 = vmatpush1.bf16.msra.mxu0 0
        %615 = vmatprep.subr.bf16.mxu0 0
        %616 = vmatpush1.bf16.msra.mxu0 0
        %617 = vmatprep.subr.bf16.mxu0 0
        %618 = vmatpush1.bf16.msra.mxu0 0
        %619 = vmatprep.subr.bf16.mxu0 0
        %620 = vmatpush1.bf16.msra.mxu0 0
        %621 = vmatprep.subr.bf16.mxu0 0
        %622 = vmatpush1.bf16.msra.mxu0 0
        %623 = vmatprep.subr.bf16.mxu0 0
        %624 = vmatpush1.bf16.msra.mxu0 0
        %625 = vmatprep.subr.bf16.mxu0 0
        %626 = vmatpush1.bf16.msra.mxu0 0
        %627 = vmatprep.subr.bf16.mxu0 0
        %628 = vmatpush1.bf16.msra.mxu0 0
        %629 = vmatprep.subr.bf16.mxu0 0
        %630 = vmatpush1.bf16.msra.mxu0 0
        %631 = vmatprep.subr.bf16.mxu0 0
        %632 = vmatpush1.bf16.msra.mxu0 0
        %633 = vmatprep.subr.bf16.mxu0 0
        %634 = vmatpush1.bf16.msra.mxu0 0
        %635 = vmatprep.subr.bf16.mxu0 0
        %636 = vmatpush1.bf16.msra.mxu0 0
        %637 = vmatprep.subr.bf16.mxu0 0
        %638 = vmatpush1.bf16.msra.mxu0 0
        %639 = vmatprep.subr.bf16.mxu0 0
        %640 = vmatpush1.bf16.msra.mxu0 0
        %641 = vmatprep.subr.bf16.mxu0 0
        %642 = vmatpush1.bf16.msra.mxu0 0
        %643 = vmatprep.mubr.bf16.mxu0 0
        %644 = vmatmul.mubr.bf16.gmra.mrb[0].mxu0 %v590
        %v645 = vpop.f32.mrb[0].mxu0
        %v646 = vadd.f32 %v520, %v645
        %v647 = vpop.f32.mrb[0].mxu0
        %v648 = vpop.f32.mrb[0].mxu0
        %v649 = vadd.f32 %v523, %v648
        %v650 = vpop.f32.mrb[0].mxu0
        %651 = vmatprep.mubr.bf16.mxu0 0
        %652 = vmatmul.mubr.bf16.gmra.mrb[0].mxu0 %v592
        %v653 = vpop.f32.mrb[0].mxu0
        %v654 = vadd.f32 %v528, %v653
        %v655 = vpop.f32.mrb[0].mxu0
        %v656 = vpop.f32.mrb[0].mxu0
        %v657 = vadd.f32 %v531, %v656
        %v658 = vpop.f32.mrb[0].mxu0
        %659 = vmatprep.mubr.bf16.mxu0 0
        %660 = vmatmul.mubr.bf16.gmra.mrb[0].mxu0 %v594
        %v661 = vpop.f32.mrb[0].mxu0
        %v662 = vadd.f32 %v536, %v661
        %v663 = vpop.f32.mrb[0].mxu0
        %v664 = vpop.f32.mrb[0].mxu0
        %v665 = vadd.f32 %v539, %v664
        %v666 = vpop.f32.mrb[0].mxu0
        %667 = vmatprep.mubr.bf16.mxu0 0
        %668 = vmatmul.mubr.bf16.gmra.mrb[0].mxu0 %v596
        %v669 = vpop.f32.mrb[0].mxu0
        %v670 = vadd.f32 %v544, %v669
        %v671 = vpop.f32.mrb[0].mxu0
        %v672 = vpop.f32.mrb[0].mxu0
        %v673 = vadd.f32 %v547, %v672
        %v674 = vpop.f32.mrb[0].mxu0
        %675 = vmatprep.mubr.bf16.mxu0 0
        %676 = vmatmul.mubr.bf16.gmra.mrb[0].mxu0 %v598
        %v677 = vpop.f32.mrb[0].mxu0
        %v678 = vadd.f32 %v552, %v677
        %v679 = vpop.f32.mrb[0].mxu0
        %v680 = vpop.f32.mrb[0].mxu0
        %v681 = vadd.f32 %v555, %v680
        %v682 = vpop.f32.mrb[0].mxu0
        %683 = vmatprep.mubr.bf16.mxu0 0
        %684 = vmatmul.mubr.bf16.gmra.mrb[0].mxu0 %v600
        %v685 = vpop.f32.mrb[0].mxu0
        %v686 = vadd.f32 %v560, %v685
        %v687 = vpop.f32.mrb[0].mxu0
        %v688 = vpop.f32.mrb[0].mxu0
        %v689 = vadd.f32 %v563, %v688
        %v690 = vpop.f32.mrb[0].mxu0
        %691 = vmatprep.mubr.bf16.mxu0 0
        %692 = vmatmul.mubr.bf16.gmra.mrb[0].mxu0 %v602
        %v693 = vpop.f32.mrb[0].mxu0
        %v694 = vadd.f32 %v568, %v693
        %v695 = vpop.f32.mrb[0].mxu0
        %v696 = vpop.f32.mrb[0].mxu0
        %v697 = vadd.f32 %v571, %v696
        %v698 = vpop.f32.mrb[0].mxu0
        %699 = vmatprep.mubr.bf16.mxu0 0
        %700 = vmatmul.mubr.bf16.gmra.mrb[0].mxu0 %v604
        %v701 = vpop.f32.mrb[0].mxu0
        %v702 = vadd.f32 %v576, %v701
        %v703 = vpop.f32.mrb[0].mxu0
        %v704 = vpop.f32.mrb[0].mxu0
        %v705 = vadd.f32 %v579, %v704
        %v706 = vpop.f32.mrb[0].mxu0
        %707 = vmatprep.mubr.bf16.mxu0 0
        %708 = vmatmul.mubr.bf16.gmra.mrb[0].mxu0 %v606
        %v709 = vpop.f32.mrb[0].mxu0
        %v710 = vadd.f32 %v584, %v709
        %v711 = vpop.f32.mrb[0].mxu0
        %v712 = vpop.f32.mrb[0].mxu0
        %v713 = vadd.f32 %v587, %v712
        %v714 = vpop.f32.mrb[0].mxu0
        %715 = vdwg.mxu0
        %v716 = vld [vmem:[%s304] sm:$0xe]
        %s717 = scalar_lea.vmem %s1, 4
        %v718 = vld [vmem:[%s717] sm:$0x3]
        %v720 = vunpack.c.l.b16 %v716
        %v721 = vpack.c.b16 %v348, %v720
        %vm722 = vcmask 1046528
        %v723 = vrot.slane %v721, 1
        %v724 = vrot.slane %v367, 1
        %v725 = vsel %vm722, %v723, %v724
        %v726 = vrot.slane %v368, 1
        %v727 = vsel %vm722, %v724, %v726
        %v728 = vrot.slane %v369, 1
        %v729 = vsel %vm722, %v726, %v728
        %v730 = vrot.slane %v370, 1
        %v731 = vsel %vm722, %v728, %v730
        %v732 = vrot.slane %v371, 1
        %v733 = vsel %vm722, %v730, %v732
        %v734 = vrot.slane %v372, 1
        %v735 = vsel %vm722, %v732, %v734
        %v736 = vrot.slane %v373, 1
        %v737 = vsel %vm722, %v734, %v736
        %v738 = vrot.slane %v374, 1
        %v739 = vsel %vm722, %v736, %v738
        %v740 = vrot.slane %v375, 1
        %v741 = vsel %vm722, %v738, %v740
        %v743 = vsel %vm453, %v725, 0
        %v746 = vsel %vm453, %v727, 0
        %v749 = vsel %vm453, %v729, 0
        %v752 = vsel %vm453, %v731, 0
        %v755 = vsel %vm453, %v733, 0
        %v758 = vsel %vm453, %v735, 0
        %v761 = vsel %vm453, %v737, 0
        %v764 = vsel %vm453, %v739, 0
        %v767 = vsel %vm453, %v741, 0
        %v770 = vsel %vm481, %v718, 0
        %772 = vmatprep.subr.bf16.mxu0 0
        %773 = vmatpush1.bf16.msra.mxu0 %v770
        %774 = vmatprep.subr.bf16.mxu0 0
        %775 = vmatpush1.bf16.msra.mxu0 0
        %776 = vmatprep.subr.bf16.mxu0 0
        %777 = vmatpush1.bf16.msra.mxu0 0
        %778 = vmatprep.subr.bf16.mxu0 0
        %779 = vmatpush1.bf16.msra.mxu0 0
        %780 = vmatprep.subr.bf16.mxu0 0
        %781 = vmatpush1.bf16.msra.mxu0 0
        %782 = vmatprep.subr.bf16.mxu0 0
        %783 = vmatpush1.bf16.msra.mxu0 0
        %784 = vmatprep.subr.bf16.mxu0 0
        %785 = vmatpush1.bf16.msra.mxu0 0
        %786 = vmatprep.subr.bf16.mxu0 0
        %787 = vmatpush1.bf16.msra.mxu0 0
        %788 = vmatprep.subr.bf16.mxu0 0
        %789 = vmatpush1.bf16.msra.mxu0 0
        %790 = vmatprep.subr.bf16.mxu0 0
        %791 = vmatpush1.bf16.msra.mxu0 0
        %792 = vmatprep.subr.bf16.mxu0 0
        %793 = vmatpush1.bf16.msra.mxu0 0
        %794 = vmatprep.subr.bf16.mxu0 0
        %795 = vmatpush1.bf16.msra.mxu0 0
        %796 = vmatprep.subr.bf16.mxu0 0
        %797 = vmatpush1.bf16.msra.mxu0 0
        %798 = vmatprep.subr.bf16.mxu0 0
        %799 = vmatpush1.bf16.msra.mxu0 0
        %800 = vmatprep.subr.bf16.mxu0 0
        %801 = vmatpush1.bf16.msra.mxu0 0
        %802 = vmatprep.subr.bf16.mxu0 0
        %803 = vmatpush1.bf16.msra.mxu0 0
        %804 = vmatprep.mubr.bf16.mxu0 0
        %805 = vmatmul.mubr.bf16.gmra.mrb[0].mxu0 %v743
        %v806 = vpop.f32.mrb[0].mxu0
        %v807 = vadd.f32 0.0, %v806
        %v808 = vpop.f32.mrb[0].mxu0
        %v809 = vpop.f32.mrb[0].mxu0
        %v810 = vadd.f32 0.0, %v809
        %v811 = vpop.f32.mrb[0].mxu0
        %812 = vmatprep.mubr.bf16.mxu0 0
        %813 = vmatmul.mubr.bf16.gmra.mrb[0].mxu0 %v746
        %v814 = vpop.f32.mrb[0].mxu0
        %v815 = vadd.f32 0.0, %v814
        %v816 = vpop.f32.mrb[0].mxu0
        %v817 = vpop.f32.mrb[0].mxu0
        %v818 = vadd.f32 0.0, %v817
        %v819 = vpop.f32.mrb[0].mxu0
        %820 = vmatprep.mubr.bf16.mxu0 0
        %821 = vmatmul.mubr.bf16.gmra.mrb[0].mxu0 %v749
        %v822 = vpop.f32.mrb[0].mxu0
        %v823 = vadd.f32 0.0, %v822
        %v824 = vpop.f32.mrb[0].mxu0
        %v825 = vpop.f32.mrb[0].mxu0
        %v826 = vadd.f32 0.0, %v825
        %v827 = vpop.f32.mrb[0].mxu0
        %828 = vmatprep.mubr.bf16.mxu0 0
        %829 = vmatmul.mubr.bf16.gmra.mrb[0].mxu0 %v752
        %v830 = vpop.f32.mrb[0].mxu0
        %v831 = vadd.f32 0.0, %v830
        %v832 = vpop.f32.mrb[0].mxu0
        %v833 = vpop.f32.mrb[0].mxu0
        %v834 = vadd.f32 0.0, %v833
        %v835 = vpop.f32.mrb[0].mxu0
        %836 = vmatprep.mubr.bf16.mxu0 0
        %837 = vmatmul.mubr.bf16.gmra.mrb[0].mxu0 %v755
        %v838 = vpop.f32.mrb[0].mxu0
        %v839 = vadd.f32 0.0, %v838
        %v840 = vpop.f32.mrb[0].mxu0
        %v841 = vpop.f32.mrb[0].mxu0
        %v842 = vadd.f32 0.0, %v841
        %v843 = vpop.f32.mrb[0].mxu0
        %844 = vmatprep.mubr.bf16.mxu0 0
        %845 = vmatmul.mubr.bf16.gmra.mrb[0].mxu0 %v758
        %v846 = vpop.f32.mrb[0].mxu0
        %v847 = vadd.f32 0.0, %v846
        %v848 = vpop.f32.mrb[0].mxu0
        %v849 = vpop.f32.mrb[0].mxu0
        %v850 = vadd.f32 0.0, %v849
        %v851 = vpop.f32.mrb[0].mxu0
        %852 = vmatprep.mubr.bf16.mxu0 0
        %853 = vmatmul.mubr.bf16.gmra.mrb[0].mxu0 %v761
        %v854 = vpop.f32.mrb[0].mxu0
        %v855 = vadd.f32 0.0, %v854
        %v856 = vpop.f32.mrb[0].mxu0
        %v857 = vpop.f32.mrb[0].mxu0
        %v858 = vadd.f32 0.0, %v857
        %v859 = vpop.f32.mrb[0].mxu0
        %860 = vmatprep.mubr.bf16.mxu0 0
        %861 = vmatmul.mubr.bf16.gmra.mrb[0].mxu0 %v764
        %v862 = vpop.f32.mrb[0].mxu0
        %v863 = vadd.f32 0.0, %v862
        %v864 = vpop.f32.mrb[0].mxu0
        %v865 = vpop.f32.mrb[0].mxu0
        %v866 = vadd.f32 0.0, %v865
        %v867 = vpop.f32.mrb[0].mxu0
        %868 = vmatprep.mubr.bf16.mxu0 0
        %869 = vmatmul.mubr.bf16.gmra.mrb[0].mxu0 %v767
        %v870 = vpop.f32.mrb[0].mxu0
        %v871 = vadd.f32 0.0, %v870
        %v872 = vpop.f32.mrb[0].mxu0
        %v873 = vpop.f32.mrb[0].mxu0
        %v874 = vadd.f32 0.0, %v873
        %v875 = vpop.f32.mrb[0].mxu0
        %876 = vdwg.mxu0
        %v877 = vadd.f32 %v646, %v807
        %v878 = vadd.f32 %v649, %v810
        %v879 = vadd.f32 %v654, %v815
        %v880 = vadd.f32 %v657, %v818
        %v881 = vadd.f32 %v662, %v823
        %v882 = vadd.f32 %v665, %v826
        %v883 = vadd.f32 %v670, %v831
        %v884 = vadd.f32 %v673, %v834
        %v885 = vadd.f32 %v678, %v839
        %v886 = vadd.f32 %v681, %v842
        %v887 = vadd.f32 %v686, %v847
        %v888 = vadd.f32 %v689, %v850
        %v889 = vadd.f32 %v694, %v855
        %v890 = vadd.f32 %v697, %v858
        %v891 = vadd.f32 %v702, %v863
        %v892 = vadd.f32 %v705, %v866
        %v893 = vadd.f32 %v710, %v871
        %v894 = vadd.f32 %v713, %v874
        %v895 = vld [vmem:[%s304 + $0x8] sm:$0xe]
        %v896 = vld [vmem:[%s304 + $0xc] sm:$0xf]
        %v897 = vld [vmem:[%s304 + $0x10] sm:$0xf]
        %v898 = vld [vmem:[%s304 + $0x14] sm:$0xf]
        %v899 = vld [vmem:[%s304 + $0x18] sm:$0xf]
        %v900 = vld [vmem:[%s304 + $0x1c] sm:$0xf]
        %v901 = vld [vmem:[%s304 + $0x20] sm:$0xf]
        %v902 = vld [vmem:[%s304 + $0x24] sm:$0xf]
        %v903 = vld [vmem:[%s304 + $0x28] sm:$0xf]
        %v904 = vld [vmem:[%s304 + $0x2c] sm:$0xf]
        %v905 = vld [vmem:[%s304 + $0x30] sm:$0xf]
        %v906 = vld [vmem:[%s304 + $0x34] sm:$0xf]
        %v907 = vld [vmem:[%s304 + $0x38] sm:$0xf]
        %v908 = vld [vmem:[%s304 + $0x3c] sm:$0xf]
        %v909 = vld [vmem:[%s304 + $0x40] sm:$0xf]
        %v910 = vld [vmem:[%s304 + $0x44] sm:$0xf]
        %v911 = vld [vmem:[%s304 + $0x48] sm:$0xf]
        %v912 = vld [vmem:[%s304 + $0x4c] sm:$0xf]
        %v913 = vld [vmem:[%s304 + $0x50] sm:$0x1]
        %s914 = scalar_lea.vmem %s1, 6
        %v915 = vld [vmem:[%s914] sm:$0x3]
        %v935 = vunpack.c.l.b16 %v895
        %v936 = vunpack.c.l.b16 %v896
        %v937 = vunpack.c.l.b16 %v897
        %v938 = vunpack.c.l.b16 %v898
        %v939 = vunpack.c.l.b16 %v899
        %v940 = vunpack.c.l.b16 %v900
        %v941 = vunpack.c.l.b16 %v901
        %v942 = vunpack.c.l.b16 %v902
        %v943 = vunpack.c.l.b16 %v903
        %v944 = vunpack.c.l.b16 %v904
        %v945 = vunpack.c.l.b16 %v905
        %v946 = vunpack.c.l.b16 %v906
        %v947 = vunpack.c.l.b16 %v907
        %v948 = vunpack.c.l.b16 %v908
        %v949 = vunpack.c.l.b16 %v909
        %v950 = vunpack.c.l.b16 %v910
        %v951 = vunpack.c.l.b16 %v911
        %v952 = vunpack.c.l.b16 %v912
        %v953 = vunpack.c.l.b16 %v913
        %v954 = vpack.c.b16 %v936, %v935
        %v955 = vpack.c.b16 %v938, %v937
        %v956 = vpack.c.b16 %v940, %v939
        %v957 = vpack.c.b16 %v942, %v941
        %v958 = vpack.c.b16 %v944, %v943
        %v959 = vpack.c.b16 %v946, %v945
        %v960 = vpack.c.b16 %v948, %v947
        %v961 = vpack.c.b16 %v950, %v949
        %v962 = vpack.c.b16 %v952, %v951
        %v963 = vpack.c.b16 %v953, %v953
        %v964 = vrot.slane %v954, 1
        %v965 = vrot.slane %v955, 1
        %v966 = vsel %vm722, %v964, %v965
        %v967 = vrot.slane %v956, 1
        %v968 = vsel %vm722, %v965, %v967
        %v969 = vrot.slane %v957, 1
        %v970 = vsel %vm722, %v967, %v969
        %v971 = vrot.slane %v958, 1
        %v972 = vsel %vm722, %v969, %v971
        %v973 = vrot.slane %v959, 1
        %v974 = vsel %vm722, %v971, %v973
        %v975 = vrot.slane %v960, 1
        %v976 = vsel %vm722, %v973, %v975
        %v977 = vrot.slane %v961, 1
        %v978 = vsel %vm722, %v975, %v977
        %v979 = vrot.slane %v962, 1
        %v980 = vsel %vm722, %v977, %v979
        %v981 = vrot.slane %v963, 1
        %v982 = vsel %vm722, %v979, %v981
        %v984 = vsel %vm453, %v966, 0
        %v987 = vsel %vm453, %v968, 0
        %v990 = vsel %vm453, %v970, 0
        %v993 = vsel %vm453, %v972, 0
        %v996 = vsel %vm453, %v974, 0
        %v999 = vsel %vm453, %v976, 0
        %v1002 = vsel %vm453, %v978, 0
        %v1005 = vsel %vm453, %v980, 0
        %v1008 = vsel %vm453, %v982, 0
        %v1011 = vsel %vm481, %v915, 0
        %1013 = vmatprep.subr.bf16.mxu0 0
        %1014 = vmatpush1.bf16.msra.mxu0 %v1011
        %1015 = vmatprep.subr.bf16.mxu0 0
        %1016 = vmatpush1.bf16.msra.mxu0 0
        %1017 = vmatprep.subr.bf16.mxu0 0
        %1018 = vmatpush1.bf16.msra.mxu0 0
        %1019 = vmatprep.subr.bf16.mxu0 0
        %1020 = vmatpush1.bf16.msra.mxu0 0
        %1021 = vmatprep.subr.bf16.mxu0 0
        %1022 = vmatpush1.bf16.msra.mxu0 0
        %1023 = vmatprep.subr.bf16.mxu0 0
        %1024 = vmatpush1.bf16.msra.mxu0 0
        %1025 = vmatprep.subr.bf16.mxu0 0
        %1026 = vmatpush1.bf16.msra.mxu0 0
        %1027 = vmatprep.subr.bf16.mxu0 0
        %1028 = vmatpush1.bf16.msra.mxu0 0
        %1029 = vmatprep.subr.bf16.mxu0 0
        %1030 = vmatpush1.bf16.msra.mxu0 0
        %1031 = vmatprep.subr.bf16.mxu0 0
        %1032 = vmatpush1.bf16.msra.mxu0 0
        %1033 = vmatprep.subr.bf16.mxu0 0
        %1034 = vmatpush1.bf16.msra.mxu0 0
        %1035 = vmatprep.subr.bf16.mxu0 0
        %1036 = vmatpush1.bf16.msra.mxu0 0
        %1037 = vmatprep.subr.bf16.mxu0 0
        %1038 = vmatpush1.bf16.msra.mxu0 0
        %1039 = vmatprep.subr.bf16.mxu0 0
        %1040 = vmatpush1.bf16.msra.mxu0 0
        %1041 = vmatprep.subr.bf16.mxu0 0
        %1042 = vmatpush1.bf16.msra.mxu0 0
        %1043 = vmatprep.subr.bf16.mxu0 0
        %1044 = vmatpush1.bf16.msra.mxu0 0
        %1045 = vmatprep.mubr.bf16.mxu0 0
        %1046 = vmatmul.mubr.bf16.gmra.mrb[0].mxu0 %v984
        %v1047 = vpop.f32.mrb[0].mxu0
        %v1048 = vadd.f32 0.0, %v1047
        %v1049 = vpop.f32.mrb[0].mxu0
        %v1050 = vpop.f32.mrb[0].mxu0
        %v1051 = vadd.f32 0.0, %v1050
        %v1052 = vpop.f32.mrb[0].mxu0
        %1053 = vmatprep.mubr.bf16.mxu0 0
        %1054 = vmatmul.mubr.bf16.gmra.mrb[0].mxu0 %v987
        %v1055 = vpop.f32.mrb[0].mxu0
        %v1056 = vadd.f32 0.0, %v1055
        %v1057 = vpop.f32.mrb[0].mxu0
        %v1058 = vpop.f32.mrb[0].mxu0
        %v1059 = vadd.f32 0.0, %v1058
        %v1060 = vpop.f32.mrb[0].mxu0
        %1061 = vmatprep.mubr.bf16.mxu0 0
        %1062 = vmatmul.mubr.bf16.gmra.mrb[0].mxu0 %v990
        %v1063 = vpop.f32.mrb[0].mxu0
        %v1064 = vadd.f32 0.0, %v1063
        %v1065 = vpop.f32.mrb[0].mxu0
        %v1066 = vpop.f32.mrb[0].mxu0
        %v1067 = vadd.f32 0.0, %v1066
        %v1068 = vpop.f32.mrb[0].mxu0
        %1069 = vmatprep.mubr.bf16.mxu0 0
        %1070 = vmatmul.mubr.bf16.gmra.mrb[0].mxu0 %v993
        %v1071 = vpop.f32.mrb[0].mxu0
        %v1072 = vadd.f32 0.0, %v1071
        %v1073 = vpop.f32.mrb[0].mxu0
        %v1074 = vpop.f32.mrb[0].mxu0
        %v1075 = vadd.f32 0.0, %v1074
        %v1076 = vpop.f32.mrb[0].mxu0
        %1077 = vmatprep.mubr.bf16.mxu0 0
        %1078 = vmatmul.mubr.bf16.gmra.mrb[0].mxu0 %v996
        %v1079 = vpop.f32.mrb[0].mxu0
        %v1080 = vadd.f32 0.0, %v1079
        %v1081 = vpop.f32.mrb[0].mxu0
        %v1082 = vpop.f32.mrb[0].mxu0
        %v1083 = vadd.f32 0.0, %v1082
        %v1084 = vpop.f32.mrb[0].mxu0
        %1085 = vmatprep.mubr.bf16.mxu0 0
        %1086 = vmatmul.mubr.bf16.gmra.mrb[0].mxu0 %v999
        %v1087 = vpop.f32.mrb[0].mxu0
        %v1088 = vadd.f32 0.0, %v1087
        %v1089 = vpop.f32.mrb[0].mxu0
        %v1090 = vpop.f32.mrb[0].mxu0
        %v1091 = vadd.f32 0.0, %v1090
        %v1092 = vpop.f32.mrb[0].mxu0
        %1093 = vmatprep.mubr.bf16.mxu0 0
        %1094 = vmatmul.mubr.bf16.gmra.mrb[0].mxu0 %v1002
        %v1095 = vpop.f32.mrb[0].mxu0
        %v1096 = vadd.f32 0.0, %v1095
        %v1097 = vpop.f32.mrb[0].mxu0
        %v1098 = vpop.f32.mrb[0].mxu0
        %v1099 = vadd.f32 0.0, %v1098
        %v1100 = vpop.f32.mrb[0].mxu0
        %1101 = vmatprep.mubr.bf16.mxu0 0
        %1102 = vmatmul.mubr.bf16.gmra.mrb[0].mxu0 %v1005
        %v1103 = vpop.f32.mrb[0].mxu0
        %v1104 = vadd.f32 0.0, %v1103
        %v1105 = vpop.f32.mrb[0].mxu0
        %v1106 = vpop.f32.mrb[0].mxu0
        %v1107 = vadd.f32 0.0, %v1106
        %v1108 = vpop.f32.mrb[0].mxu0
        %1109 = vmatprep.mubr.bf16.mxu0 0
        %1110 = vmatmul.mubr.bf16.gmra.mrb[0].mxu0 %v1008
        %v1111 = vpop.f32.mrb[0].mxu0
        %v1112 = vadd.f32 0.0, %v1111
        %v1113 = vpop.f32.mrb[0].mxu0
        %v1114 = vpop.f32.mrb[0].mxu0
        %v1115 = vadd.f32 0.0, %v1114
        %v1116 = vpop.f32.mrb[0].mxu0
        %1117 = vdwg.mxu0
        %v1118 = vadd.f32 %v877, %v1048
        %v1119 = vadd.f32 %v878, %v1051
        %v1120 = vadd.f32 %v879, %v1056
        %v1121 = vadd.f32 %v880, %v1059
        %v1122 = vadd.f32 %v881, %v1064
        %v1123 = vadd.f32 %v882, %v1067
        %v1124 = vadd.f32 %v883, %v1072
        %v1125 = vadd.f32 %v884, %v1075
        %v1126 = vadd.f32 %v885, %v1080
        %v1127 = vadd.f32 %v886, %v1083
        %v1128 = vadd.f32 %v887, %v1088
        %v1129 = vadd.f32 %v888, %v1091
        %v1130 = vadd.f32 %v889, %v1096
        %v1131 = vadd.f32 %v890, %v1099
        %v1132 = vadd.f32 %v891, %v1104
        %v1133 = vadd.f32 %v892, %v1107
        %v1134 = vadd.f32 %v893, %v1112
        %v1135 = vadd.f32 %v894, %v1115
        %v1136 = vld [vmem:[%s304 + $0x50] sm:$0x3]
        %s1137 = scalar_lea.vmem %s1, 8
        %v1138 = vld [vmem:[%s1137] sm:$0x3]
        %v1140 = vunpack.c.l.b16 %v1136
        %v1141 = vpack.c.b16 %v1140, %v1140
        %vm1142 = vsmask.f32 6400
        %v1144 = vshrl.u32 %v954, 16
        %v1146 = vrot.slane %v1144, 1
        %v1147 = vshll.u32 %v954, 16
        %v1149 = vrot.slane %v1147, 2
        %v1150 = vor.u32 %v1146, %v1149
        %v1152 = vshrl.u32 %v955, 16
        %v1154 = vrot.slane %v1152, 1
        %v1155 = vshll.u32 %v955, 16
        %v1157 = vrot.slane %v1155, 2
        %v1158 = vor.u32 %v1154, %v1157
        %v1159 = vsel %vm1142, %v1150, %v1158
        %v1161 = vshrl.u32 %v956, 16
        %v1163 = vrot.slane %v1161, 1
        %v1164 = vshll.u32 %v956, 16
        %v1166 = vrot.slane %v1164, 2
        %v1167 = vor.u32 %v1163, %v1166
        %v1168 = vsel %vm1142, %v1158, %v1167
        %v1170 = vshrl.u32 %v957, 16
        %v1172 = vrot.slane %v1170, 1
        %v1173 = vshll.u32 %v957, 16
        %v1175 = vrot.slane %v1173, 2
        %v1176 = vor.u32 %v1172, %v1175
        %v1177 = vsel %vm1142, %v1167, %v1176
        %v1179 = vshrl.u32 %v958, 16
        %v1181 = vrot.slane %v1179, 1
        %v1182 = vshll.u32 %v958, 16
        %v1184 = vrot.slane %v1182, 2
        %v1185 = vor.u32 %v1181, %v1184
        %v1186 = vsel %vm1142, %v1176, %v1185
        %v1188 = vshrl.u32 %v959, 16
        %v1190 = vrot.slane %v1188, 1
        %v1191 = vshll.u32 %v959, 16
        %v1193 = vrot.slane %v1191, 2
        %v1194 = vor.u32 %v1190, %v1193
        %v1195 = vsel %vm1142, %v1185, %v1194
        %v1197 = vshrl.u32 %v960, 16
        %v1199 = vrot.slane %v1197, 1
        %v1200 = vshll.u32 %v960, 16
        %v1202 = vrot.slane %v1200, 2
        %v1203 = vor.u32 %v1199, %v1202
        %v1204 = vsel %vm1142, %v1194, %v1203
        %v1206 = vshrl.u32 %v961, 16
        %v1208 = vrot.slane %v1206, 1
        %v1209 = vshll.u32 %v961, 16
        %v1211 = vrot.slane %v1209, 2
        %v1212 = vor.u32 %v1208, %v1211
        %v1213 = vsel %vm1142, %v1203, %v1212
        %v1215 = vshrl.u32 %v962, 16
        %v1217 = vrot.slane %v1215, 1
        %v1218 = vshll.u32 %v962, 16
        %v1220 = vrot.slane %v1218, 2
        %v1221 = vor.u32 %v1217, %v1220
        %v1222 = vsel %vm1142, %v1212, %v1221
        %v1224 = vshrl.u32 %v1141, 16
        %v1226 = vrot.slane %v1224, 1
        %v1227 = vshll.u32 %v1141, 16
        %v1229 = vrot.slane %v1227, 2
        %v1230 = vor.u32 %v1226, %v1229
        %v1231 = vsel %vm1142, %v1221, %v1230
        %v1233 = vsel %vm453, %v1159, 0
        %v1236 = vsel %vm453, %v1168, 0
        %v1239 = vsel %vm453, %v1177, 0
        %v1242 = vsel %vm453, %v1186, 0
        %v1245 = vsel %vm453, %v1195, 0
        %v1248 = vsel %vm453, %v1204, 0
        %v1251 = vsel %vm453, %v1213, 0
        %v1254 = vsel %vm453, %v1222, 0
        %v1257 = vsel %vm453, %v1231, 0
        %v1260 = vsel %vm481, %v1138, 0
        %1262 = vmatprep.subr.bf16.mxu0 0
        %1263 = vmatpush1.bf16.msra.mxu0 %v1260
        %1264 = vmatprep.subr.bf16.mxu0 0
        %1265 = vmatpush1.bf16.msra.mxu0 0
        %1266 = vmatprep.subr.bf16.mxu0 0
        %1267 = vmatpush1.bf16.msra.mxu0 0
        %1268 = vmatprep.subr.bf16.mxu0 0
        %1269 = vmatpush1.bf16.msra.mxu0 0
        %1270 = vmatprep.subr.bf16.mxu0 0
        %1271 = vmatpush1.bf16.msra.mxu0 0
        %1272 = vmatprep.subr.bf16.mxu0 0
        %1273 = vmatpush1.bf16.msra.mxu0 0
        %1274 = vmatprep.subr.bf16.mxu0 0
        %1275 = vmatpush1.bf16.msra.mxu0 0
        %1276 = vmatprep.subr.bf16.mxu0 0
        %1277 = vmatpush1.bf16.msra.mxu0 0
        %1278 = vmatprep.subr.bf16.mxu0 0
        %1279 = vmatpush1.bf16.msra.mxu0 0
        %1280 = vmatprep.subr.bf16.mxu0 0
        %1281 = vmatpush1.bf16.msra.mxu0 0
        %1282 = vmatprep.subr.bf16.mxu0 0
        %1283 = vmatpush1.bf16.msra.mxu0 0
        %1284 = vmatprep.subr.bf16.mxu0 0
        %1285 = vmatpush1.bf16.msra.mxu0 0
        %1286 = vmatprep.subr.bf16.mxu0 0
        %1287 = vmatpush1.bf16.msra.mxu0 0
        %1288 = vmatprep.subr.bf16.mxu0 0
        %1289 = vmatpush1.bf16.msra.mxu0 0
        %1290 = vmatprep.subr.bf16.mxu0 0
        %1291 = vmatpush1.bf16.msra.mxu0 0
        %1292 = vmatprep.subr.bf16.mxu0 0
        %1293 = vmatpush1.bf16.msra.mxu0 0
        %1294 = vmatprep.mubr.bf16.mxu0 0
        %1295 = vmatmul.mubr.bf16.gmra.mrb[0].mxu0 %v1233
        %v1296 = vpop.f32.mrb[0].mxu0
        %v1297 = vadd.f32 0.0, %v1296
        %v1298 = vpop.f32.mrb[0].mxu0
        %v1299 = vpop.f32.mrb[0].mxu0
        %v1300 = vadd.f32 0.0, %v1299
        %v1301 = vpop.f32.mrb[0].mxu0
        %1302 = vmatprep.mubr.bf16.mxu0 0
        %1303 = vmatmul.mubr.bf16.gmra.mrb[0].mxu0 %v1236
        %v1304 = vpop.f32.mrb[0].mxu0
        %v1305 = vadd.f32 0.0, %v1304
        %v1306 = vpop.f32.mrb[0].mxu0
        %v1307 = vpop.f32.mrb[0].mxu0
        %v1308 = vadd.f32 0.0, %v1307
        %v1309 = vpop.f32.mrb[0].mxu0
        %1310 = vmatprep.mubr.bf16.mxu0 0
        %1311 = vmatmul.mubr.bf16.gmra.mrb[0].mxu0 %v1239
        %v1312 = vpop.f32.mrb[0].mxu0
        %v1313 = vadd.f32 0.0, %v1312
        %v1314 = vpop.f32.mrb[0].mxu0
        %v1315 = vpop.f32.mrb[0].mxu0
        %v1316 = vadd.f32 0.0, %v1315
        %v1317 = vpop.f32.mrb[0].mxu0
        %1318 = vmatprep.mubr.bf16.mxu0 0
        %1319 = vmatmul.mubr.bf16.gmra.mrb[0].mxu0 %v1242
        %v1320 = vpop.f32.mrb[0].mxu0
        %v1321 = vadd.f32 0.0, %v1320
        %v1322 = vpop.f32.mrb[0].mxu0
        %v1323 = vpop.f32.mrb[0].mxu0
        %v1324 = vadd.f32 0.0, %v1323
        %v1325 = vpop.f32.mrb[0].mxu0
        %1326 = vmatprep.mubr.bf16.mxu0 0
        %1327 = vmatmul.mubr.bf16.gmra.mrb[0].mxu0 %v1245
        %v1328 = vpop.f32.mrb[0].mxu0
        %v1329 = vadd.f32 0.0, %v1328
        %v1330 = vpop.f32.mrb[0].mxu0
        %v1331 = vpop.f32.mrb[0].mxu0
        %v1332 = vadd.f32 0.0, %v1331
        %v1333 = vpop.f32.mrb[0].mxu0
        %1334 = vmatprep.mubr.bf16.mxu0 0
        %1335 = vmatmul.mubr.bf16.gmra.mrb[0].mxu0 %v1248
        %v1336 = vpop.f32.mrb[0].mxu0
        %v1337 = vadd.f32 0.0, %v1336
        %v1338 = vpop.f32.mrb[0].mxu0
        %v1339 = vpop.f32.mrb[0].mxu0
        %v1340 = vadd.f32 0.0, %v1339
        %v1341 = vpop.f32.mrb[0].mxu0
        %1342 = vmatprep.mubr.bf16.mxu0 0
        %1343 = vmatmul.mubr.bf16.gmra.mrb[0].mxu0 %v1251
        %v1344 = vpop.f32.mrb[0].mxu0
        %v1345 = vadd.f32 0.0, %v1344
        %v1346 = vpop.f32.mrb[0].mxu0
        %v1347 = vpop.f32.mrb[0].mxu0
        %v1348 = vadd.f32 0.0, %v1347
        %v1349 = vpop.f32.mrb[0].mxu0
        %1350 = vmatprep.mubr.bf16.mxu0 0
        %1351 = vmatmul.mubr.bf16.gmra.mrb[0].mxu0 %v1254
        %v1352 = vpop.f32.mrb[0].mxu0
        %v1353 = vadd.f32 0.0, %v1352
        %v1354 = vpop.f32.mrb[0].mxu0
        %v1355 = vpop.f32.mrb[0].mxu0
        %v1356 = vadd.f32 0.0, %v1355
        %v1357 = vpop.f32.mrb[0].mxu0
        %1358 = vmatprep.mubr.bf16.mxu0 0
        %1359 = vmatmul.mubr.bf16.gmra.mrb[0].mxu0 %v1257
        %v1360 = vpop.f32.mrb[0].mxu0
        %v1361 = vadd.f32 0.0, %v1360
        %v1362 = vpop.f32.mrb[0].mxu0
        %v1363 = vpop.f32.mrb[0].mxu0
        %v1364 = vadd.f32 0.0, %v1363
        %v1365 = vpop.f32.mrb[0].mxu0
        %1366 = vdwg.mxu0
        %v1367 = vadd.f32 %v1118, %v1297
        %v1368 = vadd.f32 %v1119, %v1300
        %v1369 = vadd.f32 %v1120, %v1305
        %v1370 = vadd.f32 %v1121, %v1308
        %v1371 = vadd.f32 %v1122, %v1313
        %v1372 = vadd.f32 %v1123, %v1316
        %v1373 = vadd.f32 %v1124, %v1321
        %v1374 = vadd.f32 %v1125, %v1324
        %v1375 = vadd.f32 %v1126, %v1329
        %v1376 = vadd.f32 %v1127, %v1332
        %v1377 = vadd.f32 %v1128, %v1337
        %v1378 = vadd.f32 %v1129, %v1340
        %v1379 = vadd.f32 %v1130, %v1345
        %v1380 = vadd.f32 %v1131, %v1348
        %v1381 = vadd.f32 %v1132, %v1353
        %v1382 = vadd.f32 %v1133, %v1356
        %v1383 = vadd.f32 %v1134, %v1361
        %v1384 = vadd.f32 %v1135, %v1364
        %v1385 = vld [vmem:[%s304 + $0x8] sm:$0xc]
        %s1386 = scalar_lea.vmem %s1, 10
        %v1387 = vld [vmem:[%s1386] sm:$0x3]
        %v1389 = vunpack.c.l.b16 %v1385
        %v1390 = vpack.c.b16 %v936, %v1389
        %vm1391 = vcmask 1045504
        %v1392 = vrot.slane %v1390, 2
        %v1393 = vrot.slane %v955, 2
        %v1394 = vsel %vm1391, %v1392, %v1393
        %v1395 = vrot.slane %v956, 2
        %v1396 = vsel %vm1391, %v1393, %v1395
        %v1397 = vrot.slane %v957, 2
        %v1398 = vsel %vm1391, %v1395, %v1397
        %v1399 = vrot.slane %v958, 2
        %v1400 = vsel %vm1391, %v1397, %v1399
        %v1401 = vrot.slane %v959, 2
        %v1402 = vsel %vm1391, %v1399, %v1401
        %v1403 = vrot.slane %v960, 2
        %v1404 = vsel %vm1391, %v1401, %v1403
        %v1405 = vrot.slane %v961, 2
        %v1406 = vsel %vm1391, %v1403, %v1405
        %v1407 = vrot.slane %v962, 2
        %v1408 = vsel %vm1391, %v1405, %v1407
        %v1409 = vrot.slane %v1141, 2
        %v1410 = vsel %vm1391, %v1407, %v1409
        %v1412 = vsel %vm453, %v1394, 0
        %v1415 = vsel %vm453, %v1396, 0
        %v1418 = vsel %vm453, %v1398, 0
        %v1421 = vsel %vm453, %v1400, 0
        %v1424 = vsel %vm453, %v1402, 0
        %v1427 = vsel %vm453, %v1404, 0
        %v1430 = vsel %vm453, %v1406, 0
        %v1433 = vsel %vm453, %v1408, 0
        %v1436 = vsel %vm453, %v1410, 0
        %v1439 = vsel %vm481, %v1387, 0
        %1441 = vmatprep.subr.bf16.mxu0 0
        %1442 = vmatpush1.bf16.msra.mxu0 %v1439
        %1443 = vmatprep.subr.bf16.mxu0 0
        %1444 = vmatpush1.bf16.msra.mxu0 0
        %1445 = vmatprep.subr.bf16.mxu0 0
        %1446 = vmatpush1.bf16.msra.mxu0 0
        %1447 = vmatprep.subr.bf16.mxu0 0
        %1448 = vmatpush1.bf16.msra.mxu0 0
        %1449 = vmatprep.subr.bf16.mxu0 0
        %1450 = vmatpush1.bf16.msra.mxu0 0
        %1451 = vmatprep.subr.bf16.mxu0 0
        %1452 = vmatpush1.bf16.msra.mxu0 0
        %1453 = vmatprep.subr.bf16.mxu0 0
        %1454 = vmatpush1.bf16.msra.mxu0 0
        %1455 = vmatprep.subr.bf16.mxu0 0
        %1456 = vmatpush1.bf16.msra.mxu0 0
        %1457 = vmatprep.subr.bf16.mxu0 0
        %1458 = vmatpush1.bf16.msra.mxu0 0
        %1459 = vmatprep.subr.bf16.mxu0 0
        %1460 = vmatpush1.bf16.msra.mxu0 0
        %1461 = vmatprep.subr.bf16.mxu0 0
        %1462 = vmatpush1.bf16.msra.mxu0 0
        %1463 = vmatprep.subr.bf16.mxu0 0
        %1464 = vmatpush1.bf16.msra.mxu0 0
        %1465 = vmatprep.subr.bf16.mxu0 0
        %1466 = vmatpush1.bf16.msra.mxu0 0
        %1467 = vmatprep.subr.bf16.mxu0 0
        %1468 = vmatpush1.bf16.msra.mxu0 0
        %1469 = vmatprep.subr.bf16.mxu0 0
        %1470 = vmatpush1.bf16.msra.mxu0 0
        %1471 = vmatprep.subr.bf16.mxu0 0
        %1472 = vmatpush1.bf16.msra.mxu0 0
        %1473 = vmatprep.mubr.bf16.mxu0 0
        %1474 = vmatmul.mubr.bf16.gmra.mrb[0].mxu0 %v1412
        %v1475 = vpop.f32.mrb[0].mxu0
        %v1476 = vadd.f32 0.0, %v1475
        %v1477 = vpop.f32.mrb[0].mxu0
        %v1478 = vpop.f32.mrb[0].mxu0
        %v1479 = vadd.f32 0.0, %v1478
        %v1480 = vpop.f32.mrb[0].mxu0
        %1481 = vmatprep.mubr.bf16.mxu0 0
        %1482 = vmatmul.mubr.bf16.gmra.mrb[0].mxu0 %v1415
        %v1483 = vpop.f32.mrb[0].mxu0
        %v1484 = vadd.f32 0.0, %v1483
        %v1485 = vpop.f32.mrb[0].mxu0
        %v1486 = vpop.f32.mrb[0].mxu0
        %v1487 = vadd.f32 0.0, %v1486
        %v1488 = vpop.f32.mrb[0].mxu0
        %1489 = vmatprep.mubr.bf16.mxu0 0
        %1490 = vmatmul.mubr.bf16.gmra.mrb[0].mxu0 %v1418
        %v1491 = vpop.f32.mrb[0].mxu0
        %v1492 = vadd.f32 0.0, %v1491
        %v1493 = vpop.f32.mrb[0].mxu0
        %v1494 = vpop.f32.mrb[0].mxu0
        %v1495 = vadd.f32 0.0, %v1494
        %v1496 = vpop.f32.mrb[0].mxu0
        %1497 = vmatprep.mubr.bf16.mxu0 0
        %1498 = vmatmul.mubr.bf16.gmra.mrb[0].mxu0 %v1421
        %v1499 = vpop.f32.mrb[0].mxu0
        %v1500 = vadd.f32 0.0, %v1499
        %v1501 = vpop.f32.mrb[0].mxu0
        %v1502 = vpop.f32.mrb[0].mxu0
        %v1503 = vadd.f32 0.0, %v1502
        %v1504 = vpop.f32.mrb[0].mxu0
        %1505 = vmatprep.mubr.bf16.mxu0 0
        %1506 = vmatmul.mubr.bf16.gmra.mrb[0].mxu0 %v1424
        %v1507 = vpop.f32.mrb[0].mxu0
        %v1508 = vadd.f32 0.0, %v1507
        %v1509 = vpop.f32.mrb[0].mxu0
        %v1510 = vpop.f32.mrb[0].mxu0
        %v1511 = vadd.f32 0.0, %v1510
        %v1512 = vpop.f32.mrb[0].mxu0
        %1513 = vmatprep.mubr.bf16.mxu0 0
        %1514 = vmatmul.mubr.bf16.gmra.mrb[0].mxu0 %v1427
        %v1515 = vpop.f32.mrb[0].mxu0
        %v1516 = vadd.f32 0.0, %v1515
        %v1517 = vpop.f32.mrb[0].mxu0
        %v1518 = vpop.f32.mrb[0].mxu0
        %v1519 = vadd.f32 0.0, %v1518
        %v1520 = vpop.f32.mrb[0].mxu0
        %1521 = vmatprep.mubr.bf16.mxu0 0
        %1522 = vmatmul.mubr.bf16.gmra.mrb[0].mxu0 %v1430
        %v1523 = vpop.f32.mrb[0].mxu0
        %v1524 = vadd.f32 0.0, %v1523
        %v1525 = vpop.f32.mrb[0].mxu0
        %v1526 = vpop.f32.mrb[0].mxu0
        %v1527 = vadd.f32 0.0, %v1526
        %v1528 = vpop.f32.mrb[0].mxu0
        %1529 = vmatprep.mubr.bf16.mxu0 0
        %1530 = vmatmul.mubr.bf16.gmra.mrb[0].mxu0 %v1433
        %v1531 = vpop.f32.mrb[0].mxu0
        %v1532 = vadd.f32 0.0, %v1531
        %v1533 = vpop.f32.mrb[0].mxu0
        %v1534 = vpop.f32.mrb[0].mxu0
        %v1535 = vadd.f32 0.0, %v1534
        %v1536 = vpop.f32.mrb[0].mxu0
        %1537 = vmatprep.mubr.bf16.mxu0 0
        %1538 = vmatmul.mubr.bf16.gmra.mrb[0].mxu0 %v1436
        %v1539 = vpop.f32.mrb[0].mxu0
        %v1540 = vadd.f32 0.0, %v1539
        %v1541 = vpop.f32.mrb[0].mxu0
        %v1542 = vpop.f32.mrb[0].mxu0
        %v1543 = vadd.f32 0.0, %v1542
        %v1544 = vpop.f32.mrb[0].mxu0
        %1545 = vdwg.mxu0
        %v1546 = vadd.f32 %v1367, %v1476
        %v1547 = vadd.f32 %v1368, %v1479
        %v1548 = vadd.f32 %v1369, %v1484
        %v1549 = vadd.f32 %v1370, %v1487
        %v1550 = vadd.f32 %v1371, %v1492
        %v1551 = vadd.f32 %v1372, %v1495
        %v1552 = vadd.f32 %v1373, %v1500
        %v1553 = vadd.f32 %v1374, %v1503
        %v1554 = vadd.f32 %v1375, %v1508
        %v1555 = vadd.f32 %v1376, %v1511
        %v1556 = vadd.f32 %v1377, %v1516
        %v1557 = vadd.f32 %v1378, %v1519
        %v1558 = vadd.f32 %v1379, %v1524
        %v1559 = vadd.f32 %v1380, %v1527
        %v1560 = vadd.f32 %v1381, %v1532
        %v1561 = vadd.f32 %v1382, %v1535
        %v1562 = vadd.f32 %v1383, %v1540
        %v1563 = vadd.f32 %v1384, %v1543
        %v1564 = vld [vmem:[%s304 + $0x10] sm:$0xc]
        %v1565 = vld [vmem:[%s304 + $0x14] sm:$0xf]
        %v1566 = vld [vmem:[%s304 + $0x18] sm:$0xf]
        %v1567 = vld [vmem:[%s304 + $0x1c] sm:$0xf]
        %v1568 = vld [vmem:[%s304 + $0x20] sm:$0xf]
        %v1569 = vld [vmem:[%s304 + $0x24] sm:$0xf]
        %v1570 = vld [vmem:[%s304 + $0x28] sm:$0xf]
        %v1571 = vld [vmem:[%s304 + $0x2c] sm:$0xf]
        %v1572 = vld [vmem:[%s304 + $0x30] sm:$0xf]
        %v1573 = vld [vmem:[%s304 + $0x34] sm:$0xf]
        %v1574 = vld [vmem:[%s304 + $0x38] sm:$0xf]
        %v1575 = vld [vmem:[%s304 + $0x3c] sm:$0xf]
        %v1576 = vld [vmem:[%s304 + $0x40] sm:$0xf]
        %v1577 = vld [vmem:[%s304 + $0x44] sm:$0xf]
        %v1578 = vld [vmem:[%s304 + $0x48] sm:$0xf]
        %v1579 = vld [vmem:[%s304 + $0x4c] sm:$0xf]
        %v1580 = vld [vmem:[%s304 + $0x50] sm:$0xf]
        %v1581 = vld [vmem:[%s304 + $0x54] sm:$0xf]
        %v1582 = vld [vmem:[%s304 + $0x58] sm:$0x3]
        %s1583 = scalar_lea.vmem %s1, 12
        %v1584 = vld [vmem:[%s1583] sm:$0x3]
        %v1604 = vunpack.c.l.b16 %v1564
        %v1605 = vunpack.c.l.b16 %v1565
        %v1606 = vunpack.c.l.b16 %v1566
        %v1607 = vunpack.c.l.b16 %v1567
        %v1608 = vunpack.c.l.b16 %v1568
        %v1609 = vunpack.c.l.b16 %v1569
        %v1610 = vunpack.c.l.b16 %v1570
        %v1611 = vunpack.c.l.b16 %v1571
        %v1612 = vunpack.c.l.b16 %v1572
        %v1613 = vunpack.c.l.b16 %v1573
        %v1614 = vunpack.c.l.b16 %v1574
        %v1615 = vunpack.c.l.b16 %v1575
        %v1616 = vunpack.c.l.b16 %v1576
        %v1617 = vunpack.c.l.b16 %v1577
        %v1618 = vunpack.c.l.b16 %v1578
        %v1619 = vunpack.c.l.b16 %v1579
        %v1620 = vunpack.c.l.b16 %v1580
        %v1621 = vunpack.c.l.b16 %v1581
        %v1622 = vunpack.c.l.b16 %v1582
        %v1623 = vpack.c.b16 %v1605, %v1604
        %v1624 = vpack.c.b16 %v1607, %v1606
        %v1625 = vpack.c.b16 %v1609, %v1608
        %v1626 = vpack.c.b16 %v1611, %v1610
        %v1627 = vpack.c.b16 %v1613, %v1612
        %v1628 = vpack.c.b16 %v1615, %v1614
        %v1629 = vpack.c.b16 %v1617, %v1616
        %v1630 = vpack.c.b16 %v1619, %v1618
        %v1631 = vpack.c.b16 %v1621, %v1620
        %v1632 = vpack.c.b16 %v1622, %v1622
        %v1633 = vrot.slane %v1623, 2
        %v1634 = vrot.slane %v1624, 2
        %v1635 = vsel %vm1391, %v1633, %v1634
        %v1636 = vrot.slane %v1625, 2
        %v1637 = vsel %vm1391, %v1634, %v1636
        %v1638 = vrot.slane %v1626, 2
        %v1639 = vsel %vm1391, %v1636, %v1638
        %v1640 = vrot.slane %v1627, 2
        %v1641 = vsel %vm1391, %v1638, %v1640
        %v1642 = vrot.slane %v1628, 2
        %v1643 = vsel %vm1391, %v1640, %v1642
        %v1644 = vrot.slane %v1629, 2
        %v1645 = vsel %vm1391, %v1642, %v1644
        %v1646 = vrot.slane %v1630, 2
        %v1647 = vsel %vm1391, %v1644, %v1646
        %v1648 = vrot.slane %v1631, 2
        %v1649 = vsel %vm1391, %v1646, %v1648
        %v1650 = vrot.slane %v1632, 2
        %v1651 = vsel %vm1391, %v1648, %v1650
        %v1653 = vsel %vm453, %v1635, 0
        %v1656 = vsel %vm453, %v1637, 0
        %v1659 = vsel %vm453, %v1639, 0
        %v1662 = vsel %vm453, %v1641, 0
        %v1665 = vsel %vm453, %v1643, 0
        %v1668 = vsel %vm453, %v1645, 0
        %v1671 = vsel %vm453, %v1647, 0
        %v1674 = vsel %vm453, %v1649, 0
        %v1677 = vsel %vm453, %v1651, 0
        %v1680 = vsel %vm481, %v1584, 0
        %1682 = vmatprep.subr.bf16.mxu0 0
        %1683 = vmatpush1.bf16.msra.mxu0 %v1680
        %1684 = vmatprep.subr.bf16.mxu0 0
        %1685 = vmatpush1.bf16.msra.mxu0 0
        %1686 = vmatprep.subr.bf16.mxu0 0
        %1687 = vmatpush1.bf16.msra.mxu0 0
        %1688 = vmatprep.subr.bf16.mxu0 0
        %1689 = vmatpush1.bf16.msra.mxu0 0
        %1690 = vmatprep.subr.bf16.mxu0 0
        %1691 = vmatpush1.bf16.msra.mxu0 0
        %1692 = vmatprep.subr.bf16.mxu0 0
        %1693 = vmatpush1.bf16.msra.mxu0 0
        %1694 = vmatprep.subr.bf16.mxu0 0
        %1695 = vmatpush1.bf16.msra.mxu0 0
        %1696 = vmatprep.subr.bf16.mxu0 0
        %1697 = vmatpush1.bf16.msra.mxu0 0
        %1698 = vmatprep.subr.bf16.mxu0 0
        %1699 = vmatpush1.bf16.msra.mxu0 0
        %1700 = vmatprep.subr.bf16.mxu0 0
        %1701 = vmatpush1.bf16.msra.mxu0 0
        %1702 = vmatprep.subr.bf16.mxu0 0
        %1703 = vmatpush1.bf16.msra.mxu0 0
        %1704 = vmatprep.subr.bf16.mxu0 0
        %1705 = vmatpush1.bf16.msra.mxu0 0
        %1706 = vmatprep.subr.bf16.mxu0 0
        %1707 = vmatpush1.bf16.msra.mxu0 0
        %1708 = vmatprep.subr.bf16.mxu0 0
        %1709 = vmatpush1.bf16.msra.mxu0 0
        %1710 = vmatprep.subr.bf16.mxu0 0
        %1711 = vmatpush1.bf16.msra.mxu0 0
        %1712 = vmatprep.subr.bf16.mxu0 0
        %1713 = vmatpush1.bf16.msra.mxu0 0
        %1714 = vmatprep.mubr.bf16.mxu0 0
        %1715 = vmatmul.mubr.bf16.gmra.mrb[0].mxu0 %v1653
        %v1716 = vpop.f32.mrb[0].mxu0
        %v1717 = vadd.f32 0.0, %v1716
        %v1718 = vpop.f32.mrb[0].mxu0
        %v1719 = vpop.f32.mrb[0].mxu0
        %v1720 = vadd.f32 0.0, %v1719
        %v1721 = vpop.f32.mrb[0].mxu0
        %1722 = vmatprep.mubr.bf16.mxu0 0
        %1723 = vmatmul.mubr.bf16.gmra.mrb[0].mxu0 %v1656
        %v1724 = vpop.f32.mrb[0].mxu0
        %v1725 = vadd.f32 0.0, %v1724
        %v1726 = vpop.f32.mrb[0].mxu0
        %v1727 = vpop.f32.mrb[0].mxu0
        %v1728 = vadd.f32 0.0, %v1727
        %v1729 = vpop.f32.mrb[0].mxu0
        %1730 = vmatprep.mubr.bf16.mxu0 0
        %1731 = vmatmul.mubr.bf16.gmra.mrb[0].mxu0 %v1659
        %v1732 = vpop.f32.mrb[0].mxu0
        %v1733 = vadd.f32 0.0, %v1732
        %v1734 = vpop.f32.mrb[0].mxu0
        %v1735 = vpop.f32.mrb[0].mxu0
        %v1736 = vadd.f32 0.0, %v1735
        %v1737 = vpop.f32.mrb[0].mxu0
        %1738 = vmatprep.mubr.bf16.mxu0 0
        %1739 = vmatmul.mubr.bf16.gmra.mrb[0].mxu0 %v1662
        %v1740 = vpop.f32.mrb[0].mxu0
        %v1741 = vadd.f32 0.0, %v1740
        %v1742 = vpop.f32.mrb[0].mxu0
        %v1743 = vpop.f32.mrb[0].mxu0
        %v1744 = vadd.f32 0.0, %v1743
        %v1745 = vpop.f32.mrb[0].mxu0
        %1746 = vmatprep.mubr.bf16.mxu0 0
        %1747 = vmatmul.mubr.bf16.gmra.mrb[0].mxu0 %v1665
        %v1748 = vpop.f32.mrb[0].mxu0
        %v1749 = vadd.f32 0.0, %v1748
        %v1750 = vpop.f32.mrb[0].mxu0
        %v1751 = vpop.f32.mrb[0].mxu0
        %v1752 = vadd.f32 0.0, %v1751
        %v1753 = vpop.f32.mrb[0].mxu0
        %1754 = vmatprep.mubr.bf16.mxu0 0
        %1755 = vmatmul.mubr.bf16.gmra.mrb[0].mxu0 %v1668
        %v1756 = vpop.f32.mrb[0].mxu0
        %v1757 = vadd.f32 0.0, %v1756
        %v1758 = vpop.f32.mrb[0].mxu0
        %v1759 = vpop.f32.mrb[0].mxu0
        %v1760 = vadd.f32 0.0, %v1759
        %v1761 = vpop.f32.mrb[0].mxu0
        %1762 = vmatprep.mubr.bf16.mxu0 0
        %1763 = vmatmul.mubr.bf16.gmra.mrb[0].mxu0 %v1671
        %v1764 = vpop.f32.mrb[0].mxu0
        %v1765 = vadd.f32 0.0, %v1764
        %v1766 = vpop.f32.mrb[0].mxu0
        %v1767 = vpop.f32.mrb[0].mxu0
        %v1768 = vadd.f32 0.0, %v1767
        %v1769 = vpop.f32.mrb[0].mxu0
        %1770 = vmatprep.mubr.bf16.mxu0 0
        %1771 = vmatmul.mubr.bf16.gmra.mrb[0].mxu0 %v1674
        %v1772 = vpop.f32.mrb[0].mxu0
        %v1773 = vadd.f32 0.0, %v1772
        %v1774 = vpop.f32.mrb[0].mxu0
        %v1775 = vpop.f32.mrb[0].mxu0
        %v1776 = vadd.f32 0.0, %v1775
        %v1777 = vpop.f32.mrb[0].mxu0
        %1778 = vmatprep.mubr.bf16.mxu0 0
        %1779 = vmatmul.mubr.bf16.gmra.mrb[0].mxu0 %v1677
        %v1780 = vpop.f32.mrb[0].mxu0
        %v1781 = vadd.f32 0.0, %v1780
        %v1782 = vpop.f32.mrb[0].mxu0
        %v1783 = vpop.f32.mrb[0].mxu0
        %v1784 = vadd.f32 0.0, %v1783
        %v1785 = vpop.f32.mrb[0].mxu0
        %1786 = vdwg.mxu0
        %v1787 = vadd.f32 %v1546, %v1717
        %v1788 = vadd.f32 %v1547, %v1720
        %v1789 = vadd.f32 %v1548, %v1725
        %v1790 = vadd.f32 %v1549, %v1728
        %v1791 = vadd.f32 %v1550, %v1733
        %v1792 = vadd.f32 %v1551, %v1736
        %v1793 = vadd.f32 %v1552, %v1741
        %v1794 = vadd.f32 %v1553, %v1744
        %v1795 = vadd.f32 %v1554, %v1749
        %v1796 = vadd.f32 %v1555, %v1752
        %v1797 = vadd.f32 %v1556, %v1757
        %v1798 = vadd.f32 %v1557, %v1760
        %v1799 = vadd.f32 %v1558, %v1765
        %v1800 = vadd.f32 %v1559, %v1768
        %v1801 = vadd.f32 %v1560, %v1773
        %v1802 = vadd.f32 %v1561, %v1776
        %v1803 = vadd.f32 %v1562, %v1781
        %v1804 = vadd.f32 %v1563, %v1784
        %v1805 = vld [vmem:[%s304 + $0x58] sm:$0x7]
        %s1806 = scalar_lea.vmem %s1, 14
        %v1807 = vld [vmem:[%s1806] sm:$0x3]
        %v1809 = vunpack.c.l.b16 %v1805
        %v1810 = vpack.c.b16 %v1809, %v1809
        %vm1811 = vsmask.f32 5376
        %v1813 = vshrl.u32 %v1623, 16
        %v1815 = vrot.slane %v1813, 2
        %v1816 = vshll.u32 %v1623, 16
        %v1818 = vrot.slane %v1816, 3
        %v1819 = vor.u32 %v1815, %v1818
        %v1821 = vshrl.u32 %v1624, 16
        %v1823 = vrot.slane %v1821, 2
        %v1824 = vshll.u32 %v1624, 16
        %v1826 = vrot.slane %v1824, 3
        %v1827 = vor.u32 %v1823, %v1826
        %v1828 = vsel %vm1811, %v1819, %v1827
        %v1830 = vshrl.u32 %v1625, 16
        %v1832 = vrot.slane %v1830, 2
        %v1833 = vshll.u32 %v1625, 16
        %v1835 = vrot.slane %v1833, 3
        %v1836 = vor.u32 %v1832, %v1835
        %v1837 = vsel %vm1811, %v1827, %v1836
        %v1839 = vshrl.u32 %v1626, 16
        %v1841 = vrot.slane %v1839, 2
        %v1842 = vshll.u32 %v1626, 16
        %v1844 = vrot.slane %v1842, 3
        %v1845 = vor.u32 %v1841, %v1844
        %v1846 = vsel %vm1811, %v1836, %v1845
        %v1848 = vshrl.u32 %v1627, 16
        %v1850 = vrot.slane %v1848, 2
        %v1851 = vshll.u32 %v1627, 16
        %v1853 = vrot.slane %v1851, 3
        %v1854 = vor.u32 %v1850, %v1853
        %v1855 = vsel %vm1811, %v1845, %v1854
        %v1857 = vshrl.u32 %v1628, 16
        %v1859 = vrot.slane %v1857, 2
        %v1860 = vshll.u32 %v1628, 16
        %v1862 = vrot.slane %v1860, 3
        %v1863 = vor.u32 %v1859, %v1862
        %v1864 = vsel %vm1811, %v1854, %v1863
        %v1866 = vshrl.u32 %v1629, 16
        %v1868 = vrot.slane %v1866, 2
        %v1869 = vshll.u32 %v1629, 16
        %v1871 = vrot.slane %v1869, 3
        %v1872 = vor.u32 %v1868, %v1871
        %v1873 = vsel %vm1811, %v1863, %v1872
        %v1875 = vshrl.u32 %v1630, 16
        %v1877 = vrot.slane %v1875, 2
        %v1878 = vshll.u32 %v1630, 16
        %v1880 = vrot.slane %v1878, 3
        %v1881 = vor.u32 %v1877, %v1880
        %v1882 = vsel %vm1811, %v1872, %v1881
        %v1884 = vshrl.u32 %v1631, 16
        %v1886 = vrot.slane %v1884, 2
        %v1887 = vshll.u32 %v1631, 16
        %v1889 = vrot.slane %v1887, 3
        %v1890 = vor.u32 %v1886, %v1889
        %v1891 = vsel %vm1811, %v1881, %v1890
        %v1893 = vshrl.u32 %v1810, 16
        %v1895 = vrot.slane %v1893, 2
        %v1896 = vshll.u32 %v1810, 16
        %v1898 = vrot.slane %v1896, 3
        %v1899 = vor.u32 %v1895, %v1898
        %v1900 = vsel %vm1811, %v1890, %v1899
        %v1902 = vsel %vm453, %v1828, 0
        %v1905 = vsel %vm453, %v1837, 0
        %v1908 = vsel %vm453, %v1846, 0
        %v1911 = vsel %vm453, %v1855, 0
        %v1914 = vsel %vm453, %v1864, 0
        %v1917 = vsel %vm453, %v1873, 0
        %v1920 = vsel %vm453, %v1882, 0
        %v1923 = vsel %vm453, %v1891, 0
        %v1926 = vsel %vm453, %v1900, 0
        %v1929 = vsel %vm481, %v1807, 0
        %1931 = vmatprep.subr.bf16.mxu0 0
        %1932 = vmatpush1.bf16.msra.mxu0 %v1929
        %1933 = vmatprep.subr.bf16.mxu0 0
        %1934 = vmatpush1.bf16.msra.mxu0 0
        %1935 = vmatprep.subr.bf16.mxu0 0
        %1936 = vmatpush1.bf16.msra.mxu0 0
        %1937 = vmatprep.subr.bf16.mxu0 0
        %1938 = vmatpush1.bf16.msra.mxu0 0
        %1939 = vmatprep.subr.bf16.mxu0 0
        %1940 = vmatpush1.bf16.msra.mxu0 0
        %1941 = vmatprep.subr.bf16.mxu0 0
        %1942 = vmatpush1.bf16.msra.mxu0 0
        %1943 = vmatprep.subr.bf16.mxu0 0
        %1944 = vmatpush1.bf16.msra.mxu0 0
        %1945 = vmatprep.subr.bf16.mxu0 0
        %1946 = vmatpush1.bf16.msra.mxu0 0
        %1947 = vmatprep.subr.bf16.mxu0 0
        %1948 = vmatpush1.bf16.msra.mxu0 0
        %1949 = vmatprep.subr.bf16.mxu0 0
        %1950 = vmatpush1.bf16.msra.mxu0 0
        %1951 = vmatprep.subr.bf16.mxu0 0
        %1952 = vmatpush1.bf16.msra.mxu0 0
        %1953 = vmatprep.subr.bf16.mxu0 0
        %1954 = vmatpush1.bf16.msra.mxu0 0
        %1955 = vmatprep.subr.bf16.mxu0 0
        %1956 = vmatpush1.bf16.msra.mxu0 0
        %1957 = vmatprep.subr.bf16.mxu0 0
        %1958 = vmatpush1.bf16.msra.mxu0 0
        %1959 = vmatprep.subr.bf16.mxu0 0
        %1960 = vmatpush1.bf16.msra.mxu0 0
        %1961 = vmatprep.subr.bf16.mxu0 0
        %1962 = vmatpush1.bf16.msra.mxu0 0
        %1963 = vmatprep.mubr.bf16.mxu0 0
        %1964 = vmatmul.mubr.bf16.gmra.mrb[0].mxu0 %v1902
        %v1965 = vpop.f32.mrb[0].mxu0
        %v1966 = vadd.f32 0.0, %v1965
        %v1967 = vpop.f32.mrb[0].mxu0
        %v1968 = vpop.f32.mrb[0].mxu0
        %v1969 = vadd.f32 0.0, %v1968
        %v1970 = vpop.f32.mrb[0].mxu0
        %1971 = vmatprep.mubr.bf16.mxu0 0
        %1972 = vmatmul.mubr.bf16.gmra.mrb[0].mxu0 %v1905
        %v1973 = vpop.f32.mrb[0].mxu0
        %v1974 = vadd.f32 0.0, %v1973
        %v1975 = vpop.f32.mrb[0].mxu0
        %v1976 = vpop.f32.mrb[0].mxu0
        %v1977 = vadd.f32 0.0, %v1976
        %v1978 = vpop.f32.mrb[0].mxu0
        %1979 = vmatprep.mubr.bf16.mxu0 0
        %1980 = vmatmul.mubr.bf16.gmra.mrb[0].mxu0 %v1908
        %v1981 = vpop.f32.mrb[0].mxu0
        %v1982 = vadd.f32 0.0, %v1981
        %v1983 = vpop.f32.mrb[0].mxu0
        %v1984 = vpop.f32.mrb[0].mxu0
        %v1985 = vadd.f32 0.0, %v1984
        %v1986 = vpop.f32.mrb[0].mxu0
        %1987 = vmatprep.mubr.bf16.mxu0 0
        %1988 = vmatmul.mubr.bf16.gmra.mrb[0].mxu0 %v1911
        %v1989 = vpop.f32.mrb[0].mxu0
        %v1990 = vadd.f32 0.0, %v1989
        %v1991 = vpop.f32.mrb[0].mxu0
        %v1992 = vpop.f32.mrb[0].mxu0
        %v1993 = vadd.f32 0.0, %v1992
        %v1994 = vpop.f32.mrb[0].mxu0
        %1995 = vmatprep.mubr.bf16.mxu0 0
        %1996 = vmatmul.mubr.bf16.gmra.mrb[0].mxu0 %v1914
        %v1997 = vpop.f32.mrb[0].mxu0
        %v1998 = vadd.f32 0.0, %v1997
        %v1999 = vpop.f32.mrb[0].mxu0
        %v2000 = vpop.f32.mrb[0].mxu0
        %v2001 = vadd.f32 0.0, %v2000
        %v2002 = vpop.f32.mrb[0].mxu0
        %2003 = vmatprep.mubr.bf16.mxu0 0
        %2004 = vmatmul.mubr.bf16.gmra.mrb[0].mxu0 %v1917
        %v2005 = vpop.f32.mrb[0].mxu0
        %v2006 = vadd.f32 0.0, %v2005
        %v2007 = vpop.f32.mrb[0].mxu0
        %v2008 = vpop.f32.mrb[0].mxu0
        %v2009 = vadd.f32 0.0, %v2008
        %v2010 = vpop.f32.mrb[0].mxu0
        %2011 = vmatprep.mubr.bf16.mxu0 0
        %2012 = vmatmul.mubr.bf16.gmra.mrb[0].mxu0 %v1920
        %v2013 = vpop.f32.mrb[0].mxu0
        %v2014 = vadd.f32 0.0, %v2013
        %v2015 = vpop.f32.mrb[0].mxu0
        %v2016 = vpop.f32.mrb[0].mxu0
        %v2017 = vadd.f32 0.0, %v2016
        %v2018 = vpop.f32.mrb[0].mxu0
        %2019 = vmatprep.mubr.bf16.mxu0 0
        %2020 = vmatmul.mubr.bf16.gmra.mrb[0].mxu0 %v1923
        %v2021 = vpop.f32.mrb[0].mxu0
        %v2022 = vadd.f32 0.0, %v2021
        %v2023 = vpop.f32.mrb[0].mxu0
        %v2024 = vpop.f32.mrb[0].mxu0
        %v2025 = vadd.f32 0.0, %v2024
        %v2026 = vpop.f32.mrb[0].mxu0
        %2027 = vmatprep.mubr.bf16.mxu0 0
        %2028 = vmatmul.mubr.bf16.gmra.mrb[0].mxu0 %v1926
        %v2029 = vpop.f32.mrb[0].mxu0
        %v2030 = vadd.f32 0.0, %v2029
        %v2031 = vpop.f32.mrb[0].mxu0
        %v2032 = vpop.f32.mrb[0].mxu0
        %v2033 = vadd.f32 0.0, %v2032
        %v2034 = vpop.f32.mrb[0].mxu0
        %2035 = vdwg.mxu0
        %v2036 = vadd.f32 %v1787, %v1966
        %v2037 = vadd.f32 %v1788, %v1969
        %v2038 = vadd.f32 %v1789, %v1974
        %v2039 = vadd.f32 %v1790, %v1977
        %v2040 = vadd.f32 %v1791, %v1982
        %v2041 = vadd.f32 %v1792, %v1985
        %v2042 = vadd.f32 %v1793, %v1990
        %v2043 = vadd.f32 %v1794, %v1993
        %v2044 = vadd.f32 %v1795, %v1998
        %v2045 = vadd.f32 %v1796, %v2001
        %v2046 = vadd.f32 %v1797, %v2006
        %v2047 = vadd.f32 %v1798, %v2009
        %v2048 = vadd.f32 %v1799, %v2014
        %v2049 = vadd.f32 %v1800, %v2017
        %v2050 = vadd.f32 %v1801, %v2022
        %v2051 = vadd.f32 %v1802, %v2025
        %v2052 = vadd.f32 %v1803, %v2030
        %v2053 = vadd.f32 %v1804, %v2033
        %v2054 = vld [vmem:[%s304 + $0x10] sm:$0x8]
        %s2055 = scalar_lea.vmem %s1, 16
        %v2056 = vld [vmem:[%s2055] sm:$0x3]
        %v2058 = vunpack.c.l.b16 %v2054
        %v2059 = vpack.c.b16 %v1605, %v2058
        %vm2060 = vcmask 1044480
        %v2061 = vrot.slane %v2059, 3
        %v2062 = vrot.slane %v1624, 3
        %v2063 = vsel %vm2060, %v2061, %v2062
        %v2064 = vrot.slane %v1625, 3
        %v2065 = vsel %vm2060, %v2062, %v2064
        %v2066 = vrot.slane %v1626, 3
        %v2067 = vsel %vm2060, %v2064, %v2066
        %v2068 = vrot.slane %v1627, 3
        %v2069 = vsel %vm2060, %v2066, %v2068
        %v2070 = vrot.slane %v1628, 3
        %v2071 = vsel %vm2060, %v2068, %v2070
        %v2072 = vrot.slane %v1629, 3
        %v2073 = vsel %vm2060, %v2070, %v2072
        %v2074 = vrot.slane %v1630, 3
        %v2075 = vsel %vm2060, %v2072, %v2074
        %v2076 = vrot.slane %v1631, 3
        %v2077 = vsel %vm2060, %v2074, %v2076
        %v2078 = vrot.slane %v1810, 3
        %v2079 = vsel %vm2060, %v2076, %v2078
        %v2081 = vsel %vm453, %v2063, 0
        %v2084 = vsel %vm453, %v2065, 0
        %v2087 = vsel %vm453, %v2067, 0
        %v2090 = vsel %vm453, %v2069, 0
        %v2093 = vsel %vm453, %v2071, 0
        %v2096 = vsel %vm453, %v2073, 0
        %v2099 = vsel %vm453, %v2075, 0
        %v2102 = vsel %vm453, %v2077, 0
        %v2105 = vsel %vm453, %v2079, 0
        %v2108 = vsel %vm481, %v2056, 0
        %2110 = vmatprep.subr.bf16.mxu0 0
        %2111 = vmatpush1.bf16.msra.mxu0 %v2108
        %2112 = vmatprep.subr.bf16.mxu0 0
        %2113 = vmatpush1.bf16.msra.mxu0 0
        %2114 = vmatprep.subr.bf16.mxu0 0
        %2115 = vmatpush1.bf16.msra.mxu0 0
        %2116 = vmatprep.subr.bf16.mxu0 0
        %2117 = vmatpush1.bf16.msra.mxu0 0
        %2118 = vmatprep.subr.bf16.mxu0 0
        %2119 = vmatpush1.bf16.msra.mxu0 0
        %2120 = vmatprep.subr.bf16.mxu0 0
        %2121 = vmatpush1.bf16.msra.mxu0 0
        %2122 = vmatprep.subr.bf16.mxu0 0
        %2123 = vmatpush1.bf16.msra.mxu0 0
        %2124 = vmatprep.subr.bf16.mxu0 0
        %2125 = vmatpush1.bf16.msra.mxu0 0
        %2126 = vmatprep.subr.bf16.mxu0 0
        %2127 = vmatpush1.bf16.msra.mxu0 0
        %2128 = vmatprep.subr.bf16.mxu0 0
        %2129 = vmatpush1.bf16.msra.mxu0 0
        %2130 = vmatprep.subr.bf16.mxu0 0
        %2131 = vmatpush1.bf16.msra.mxu0 0
        %2132 = vmatprep.subr.bf16.mxu0 0
        %2133 = vmatpush1.bf16.msra.mxu0 0
        %2134 = vmatprep.subr.bf16.mxu0 0
        %2135 = vmatpush1.bf16.msra.mxu0 0
        %2136 = vmatprep.subr.bf16.mxu0 0
        %2137 = vmatpush1.bf16.msra.mxu0 0
        %2138 = vmatprep.subr.bf16.mxu0 0
        %2139 = vmatpush1.bf16.msra.mxu0 0
        %2140 = vmatprep.subr.bf16.mxu0 0
        %2141 = vmatpush1.bf16.msra.mxu0 0
        %2142 = vmatprep.mubr.bf16.mxu0 0
        %2143 = vmatmul.mubr.bf16.gmra.mrb[0].mxu0 %v2081
        %v2144 = vpop.f32.mrb[0].mxu0
        %v2145 = vadd.f32 0.0, %v2144
        %v2146 = vpop.f32.mrb[0].mxu0
        %v2147 = vpop.f32.mrb[0].mxu0
        %v2148 = vadd.f32 0.0, %v2147
        %v2149 = vpop.f32.mrb[0].mxu0
        %2150 = vmatprep.mubr.bf16.mxu0 0
        %2151 = vmatmul.mubr.bf16.gmra.mrb[0].mxu0 %v2084
        %v2152 = vpop.f32.mrb[0].mxu0
        %v2153 = vadd.f32 0.0, %v2152
        %v2154 = vpop.f32.mrb[0].mxu0
        %v2155 = vpop.f32.mrb[0].mxu0
        %v2156 = vadd.f32 0.0, %v2155
        %v2157 = vpop.f32.mrb[0].mxu0
        %2158 = vmatprep.mubr.bf16.mxu0 0
        %2159 = vmatmul.mubr.bf16.gmra.mrb[0].mxu0 %v2087
        %v2160 = vpop.f32.mrb[0].mxu0
        %v2161 = vadd.f32 0.0, %v2160
        %v2162 = vpop.f32.mrb[0].mxu0
        %v2163 = vpop.f32.mrb[0].mxu0
        %v2164 = vadd.f32 0.0, %v2163
        %v2165 = vpop.f32.mrb[0].mxu0
        %2166 = vmatprep.mubr.bf16.mxu0 0
        %2167 = vmatmul.mubr.bf16.gmra.mrb[0].mxu0 %v2090
        %v2168 = vpop.f32.mrb[0].mxu0
        %v2169 = vadd.f32 0.0, %v2168
        %v2170 = vpop.f32.mrb[0].mxu0
        %v2171 = vpop.f32.mrb[0].mxu0
        %v2172 = vadd.f32 0.0, %v2171
        %v2173 = vpop.f32.mrb[0].mxu0
        %2174 = vmatprep.mubr.bf16.mxu0 0
        %2175 = vmatmul.mubr.bf16.gmra.mrb[0].mxu0 %v2093
        %v2176 = vpop.f32.mrb[0].mxu0
        %v2177 = vadd.f32 0.0, %v2176
        %v2178 = vpop.f32.mrb[0].mxu0
        %v2179 = vpop.f32.mrb[0].mxu0
        %v2180 = vadd.f32 0.0, %v2179
        %v2181 = vpop.f32.mrb[0].mxu0
        %2182 = vmatprep.mubr.bf16.mxu0 0
        %2183 = vmatmul.mubr.bf16.gmra.mrb[0].mxu0 %v2096
        %v2184 = vpop.f32.mrb[0].mxu0
        %v2185 = vadd.f32 0.0, %v2184
        %v2186 = vpop.f32.mrb[0].mxu0
        %v2187 = vpop.f32.mrb[0].mxu0
        %v2188 = vadd.f32 0.0, %v2187
        %v2189 = vpop.f32.mrb[0].mxu0
        %2190 = vmatprep.mubr.bf16.mxu0 0
        %2191 = vmatmul.mubr.bf16.gmra.mrb[0].mxu0 %v2099
        %v2192 = vpop.f32.mrb[0].mxu0
        %v2193 = vadd.f32 0.0, %v2192
        %v2194 = vpop.f32.mrb[0].mxu0
        %v2195 = vpop.f32.mrb[0].mxu0
        %v2196 = vadd.f32 0.0, %v2195
        %v2197 = vpop.f32.mrb[0].mxu0
        %2198 = vmatprep.mubr.bf16.mxu0 0
        %2199 = vmatmul.mubr.bf16.gmra.mrb[0].mxu0 %v2102
        %v2200 = vpop.f32.mrb[0].mxu0
        %v2201 = vadd.f32 0.0, %v2200
        %v2202 = vpop.f32.mrb[0].mxu0
        %v2203 = vpop.f32.mrb[0].mxu0
        %v2204 = vadd.f32 0.0, %v2203
        %v2205 = vpop.f32.mrb[0].mxu0
        %2206 = vmatprep.mubr.bf16.mxu0 0
        %2207 = vmatmul.mubr.bf16.gmra.mrb[0].mxu0 %v2105
        %v2208 = vpop.f32.mrb[0].mxu0
        %v2209 = vadd.f32 0.0, %v2208
        %v2210 = vpop.f32.mrb[0].mxu0
        %v2211 = vpop.f32.mrb[0].mxu0
        %v2212 = vadd.f32 0.0, %v2211
        %v2213 = vpop.f32.mrb[0].mxu0
        %2214 = vdwg.mxu0
        %v2215 = vadd.f32 %v2036, %v2145
        %v2216 = vadd.f32 %v2037, %v2148
        %v2217 = vadd.f32 %v2038, %v2153
        %v2218 = vadd.f32 %v2039, %v2156
        %v2219 = vadd.f32 %v2040, %v2161
        %v2220 = vadd.f32 %v2041, %v2164
        %v2221 = vadd.f32 %v2042, %v2169
        %v2222 = vadd.f32 %v2043, %v2172
        %v2223 = vadd.f32 %v2044, %v2177
        %v2224 = vadd.f32 %v2045, %v2180
        %v2225 = vadd.f32 %v2046, %v2185
        %v2226 = vadd.f32 %v2047, %v2188
        %v2227 = vadd.f32 %v2048, %v2193
        %v2228 = vadd.f32 %v2049, %v2196
        %v2229 = vadd.f32 %v2050, %v2201
        %v2230 = vadd.f32 %v2051, %v2204
        %v2231 = vadd.f32 %v2052, %v2209
        %v2232 = vadd.f32 %v2053, %v2212
        %v2233 = vld [vmem:[%s2] sm:$0x1]
        %v2235 = vlaneseq
        %v2236 = vshrl.u32 %v2235, 7
        %v2237 = vsub.s32 0, %v2236
        %v2238 = vrot.slane %v2233, %v2237
        %v2240 = vadd.f32 %v2215, %v2238
        %v2241 = vadd.f32 %v2216, %v2238
        %v2242 = vadd.f32 %v2217, %v2238
        %v2243 = vadd.f32 %v2218, %v2238
        %v2244 = vadd.f32 %v2219, %v2238
        %v2245 = vadd.f32 %v2220, %v2238
        %v2246 = vadd.f32 %v2221, %v2238
        %v2247 = vadd.f32 %v2222, %v2238
        %v2248 = vadd.f32 %v2223, %v2238
        %v2249 = vadd.f32 %v2224, %v2238
        %v2250 = vadd.f32 %v2225, %v2238
        %v2251 = vadd.f32 %v2226, %v2238
        %v2252 = vadd.f32 %v2227, %v2238
        %v2253 = vadd.f32 %v2228, %v2238
        %v2254 = vadd.f32 %v2229, %v2238
        %v2255 = vadd.f32 %v2230, %v2238
        %v2256 = vadd.f32 %v2231, %v2238
        %v2257 = vadd.f32 %v2232, %v2238
        %v2258 = vmax.f32 %v2240, 0.0
        %v2259 = vmax.f32 %v2241, 0.0
        %v2260 = vmax.f32 %v2242, 0.0
        %v2261 = vmax.f32 %v2243, 0.0
        %v2262 = vmax.f32 %v2244, 0.0
        %v2263 = vmax.f32 %v2245, 0.0
        %v2264 = vmax.f32 %v2246, 0.0
        %v2265 = vmax.f32 %v2247, 0.0
        %v2266 = vmax.f32 %v2248, 0.0
        %v2267 = vmax.f32 %v2249, 0.0
        %v2268 = vmax.f32 %v2250, 0.0
        %v2269 = vmax.f32 %v2251, 0.0
        %v2270 = vmax.f32 %v2252, 0.0
        %v2271 = vmax.f32 %v2253, 0.0
        %v2272 = vmax.f32 %v2254, 0.0
        %v2273 = vmax.f32 %v2255, 0.0
        %v2274 = vmax.f32 %v2256, 0.0
        %v2275 = vmax.f32 %v2257, 0.0
        %v2276 = vmin.f32 %v2258, 6.0
        %v2277 = vmin.f32 %v2259, 6.0
        %v2278 = vmin.f32 %v2260, 6.0
        %v2279 = vmin.f32 %v2261, 6.0
        %v2280 = vmin.f32 %v2262, 6.0
        %v2281 = vmin.f32 %v2263, 6.0
        %v2282 = vmin.f32 %v2264, 6.0
        %v2283 = vmin.f32 %v2265, 6.0
        %v2284 = vmin.f32 %v2266, 6.0
        %v2285 = vmin.f32 %v2267, 6.0
        %v2286 = vmin.f32 %v2268, 6.0
        %v2287 = vmin.f32 %v2269, 6.0
        %v2288 = vmin.f32 %v2270, 6.0
        %v2289 = vmin.f32 %v2271, 6.0
        %v2290 = vmin.f32 %v2272, 6.0
        %v2291 = vmin.f32 %v2273, 6.0
        %v2292 = vmin.f32 %v2274, 6.0
        %v2293 = vmin.f32 %v2275, 6.0
        %v2294 = vld [vmem:[%s3] sm:$0x1]
        %v2296 = vlaneseq
        %v2297 = vshrl.u32 %v2296, 7
        %v2298 = vsub.s32 0, %v2297
        %v2299 = vrot.slane %v2294, %v2298
        %v2301 = vmul.f32 %v2276, %v2299
        %v2302 = vmul.f32 %v2277, %v2299
        %v2303 = vmul.f32 %v2278, %v2299
        %v2304 = vmul.f32 %v2279, %v2299
        %v2305 = vmul.f32 %v2280, %v2299
        %v2306 = vmul.f32 %v2281, %v2299
        %v2307 = vmul.f32 %v2282, %v2299
        %v2308 = vmul.f32 %v2283, %v2299
        %v2309 = vmul.f32 %v2284, %v2299
        %v2310 = vmul.f32 %v2285, %v2299
        %v2311 = vmul.f32 %v2286, %v2299
        %v2312 = vmul.f32 %v2287, %v2299
        %v2313 = vmul.f32 %v2288, %v2299
        %v2314 = vmul.f32 %v2289, %v2299
        %v2315 = vmul.f32 %v2290, %v2299
        %v2316 = vmul.f32 %v2291, %v2299
        %v2317 = vmul.f32 %v2292, %v2299
        %v2318 = vmul.f32 %v2293, %v2299
        %v2319 = vld [vmem:[%s4] sm:$0x1]
        %v2321 = vlaneseq
        %v2322 = vshrl.u32 %v2321, 7
        %v2323 = vsub.s32 0, %v2322
        %v2324 = vrot.slane %v2319, %v2323
        %v2326 = vadd.f32 %v2301, %v2324
        %v2327 = vadd.f32 %v2302, %v2324
        %v2328 = vadd.f32 %v2303, %v2324
        %v2329 = vadd.f32 %v2304, %v2324
        %v2330 = vadd.f32 %v2305, %v2324
        %v2331 = vadd.f32 %v2306, %v2324
        %v2332 = vadd.f32 %v2307, %v2324
        %v2333 = vadd.f32 %v2308, %v2324
        %v2334 = vadd.f32 %v2309, %v2324
        %v2335 = vadd.f32 %v2310, %v2324
        %v2336 = vadd.f32 %v2311, %v2324
        %v2337 = vadd.f32 %v2312, %v2324
        %v2338 = vadd.f32 %v2313, %v2324
        %v2339 = vadd.f32 %v2314, %v2324
        %v2340 = vadd.f32 %v2315, %v2324
        %v2341 = vadd.f32 %v2316, %v2324
        %v2342 = vadd.f32 %v2317, %v2324
        %v2343 = vadd.f32 %v2318, %v2324
        %v2344 = vmax.f32 %v2326, 0.0
        %v2345 = vmax.f32 %v2327, 0.0
        %v2346 = vmax.f32 %v2328, 0.0
        %v2347 = vmax.f32 %v2329, 0.0
        %v2348 = vmax.f32 %v2330, 0.0
        %v2349 = vmax.f32 %v2331, 0.0
        %v2350 = vmax.f32 %v2332, 0.0
        %v2351 = vmax.f32 %v2333, 0.0
        %v2352 = vmax.f32 %v2334, 0.0
        %v2353 = vmax.f32 %v2335, 0.0
        %v2354 = vmax.f32 %v2336, 0.0
        %v2355 = vmax.f32 %v2337, 0.0
        %v2356 = vmax.f32 %v2338, 0.0
        %v2357 = vmax.f32 %v2339, 0.0
        %v2358 = vmax.f32 %v2340, 0.0
        %v2359 = vmax.f32 %v2341, 0.0
        %v2360 = vmax.f32 %v2342, 0.0
        %v2361 = vmax.f32 %v2343, 0.0
        %v2362 = vmin.f32 %v2344, 6.0
        %v2363 = vmin.f32 %v2345, 6.0
        %v2364 = vmin.f32 %v2346, 6.0
        %v2365 = vmin.f32 %v2347, 6.0
        %v2366 = vmin.f32 %v2348, 6.0
        %v2367 = vmin.f32 %v2349, 6.0
        %v2368 = vmin.f32 %v2350, 6.0
        %v2369 = vmin.f32 %v2351, 6.0
        %v2370 = vmin.f32 %v2352, 6.0
        %v2371 = vmin.f32 %v2353, 6.0
        %v2372 = vmin.f32 %v2354, 6.0
        %v2373 = vmin.f32 %v2355, 6.0
        %v2374 = vmin.f32 %v2356, 6.0
        %v2375 = vmin.f32 %v2357, 6.0
        %v2376 = vmin.f32 %v2358, 6.0
        %v2377 = vmin.f32 %v2359, 6.0
        %v2378 = vmin.f32 %v2360, 6.0
        %v2379 = vmin.f32 %v2361, 6.0
        %v2380 = vpack.c.bf16 %v2363, %v2362
        %v2381 = vpack.c.bf16 %v2365, %v2364
        %v2382 = vpack.c.bf16 %v2367, %v2366
        %v2383 = vpack.c.bf16 %v2369, %v2368
        %v2384 = vpack.c.bf16 %v2371, %v2370
        %v2385 = vpack.c.bf16 %v2373, %v2372
        %v2386 = vpack.c.bf16 %v2375, %v2374
        %v2387 = vpack.c.bf16 %v2377, %v2376
        %v2388 = vpack.c.bf16 %v2379, %v2378
        %v2389 = vld [vmem:[%s5] sm:$0xf]
        %v2390 = vld [vmem:[%s5 + $0x4] sm:$0xf]
        %v2391 = vld [vmem:[%s5 + $0x8] sm:$0xf]
        %v2392 = vld [vmem:[%s5 + $0xc] sm:$0xf]
        %v2393 = vld [vmem:[%s5 + $0x10] sm:$0xf]
        %v2394 = vld [vmem:[%s5 + $0x14] sm:$0xf]
        %v2395 = vld [vmem:[%s5 + $0x18] sm:$0xf]
        %v2396 = vld [vmem:[%s5 + $0x1c] sm:$0xf]
        %v2397 = vld [vmem:[%s5 + $0x20] sm:$0xf]
        %v2398 = vld [vmem:[%s5 + $0x24] sm:$0xf]
        %v2399 = vld [vmem:[%s5 + $0x28] sm:$0xf]
        %v2400 = vld [vmem:[%s5 + $0x2c] sm:$0xf]
        %v2401 = vld [vmem:[%s5 + $0x30] sm:$0xf]
        %v2402 = vld [vmem:[%s5 + $0x34] sm:$0xf]
        %v2403 = vld [vmem:[%s5 + $0x38] sm:$0xf]
        %v2404 = vld [vmem:[%s5 + $0x3c] sm:$0xf]
        %v2405 = vld [vmem:[%s6] sm:$0x1]
        %v2407 = vlaneseq
        %v2408 = vshrl.u32 %v2407, 7
        %v2409 = vsub.s32 0, %v2408
        %v2410 = vrot.slane %v2405, %v2409
        %v2428 = vunpack.c.l.b16 %v2389
        %v2429 = vunpack.c.l.b16 %v2390
        %v2430 = vunpack.c.l.b16 %v2391
        %v2431 = vunpack.c.l.b16 %v2392
        %v2432 = vunpack.c.l.b16 %v2393
        %v2433 = vunpack.c.l.b16 %v2394
        %v2434 = vunpack.c.l.b16 %v2395
        %v2435 = vunpack.c.l.b16 %v2396
        %v2436 = vunpack.c.l.b16 %v2397
        %v2437 = vunpack.c.l.b16 %v2398
        %v2438 = vunpack.c.l.b16 %v2399
        %v2439 = vunpack.c.l.b16 %v2400
        %v2440 = vunpack.c.l.b16 %v2401
        %v2441 = vunpack.c.l.b16 %v2402
        %v2442 = vunpack.c.l.b16 %v2403
        %v2443 = vunpack.c.l.b16 %v2404
        %v2444 = vpack.c.b16 %v2429, %v2428
        %v2445 = vpack.c.b16 %v2431, %v2430
        %v2446 = vpack.c.b16 %v2433, %v2432
        %v2447 = vpack.c.b16 %v2435, %v2434
        %v2448 = vpack.c.b16 %v2437, %v2436
        %v2449 = vpack.c.b16 %v2439, %v2438
        %v2450 = vpack.c.b16 %v2441, %v2440
        %v2451 = vpack.c.b16 %v2443, %v2442
        %2460 = vmatprep.subr.bf16.mxu0 0
        %2461 = vmatpush1.bf16.msra.mxu0 %v2444
        %2462 = vmatprep.subr.bf16.mxu0 0
        %2463 = vmatpush1.bf16.msra.mxu0 %v2445
        %2464 = vmatprep.subr.bf16.mxu0 0
        %2465 = vmatpush1.bf16.msra.mxu0 %v2446
        %2466 = vmatprep.subr.bf16.mxu0 0
        %2467 = vmatpush1.bf16.msra.mxu0 %v2447
        %2468 = vmatprep.subr.bf16.mxu0 0
        %2469 = vmatpush1.bf16.msra.mxu0 %v2448
        %2470 = vmatprep.subr.bf16.mxu0 0
        %2471 = vmatpush1.bf16.msra.mxu0 %v2449
        %2472 = vmatprep.subr.bf16.mxu0 0
        %2473 = vmatpush1.bf16.msra.mxu0 %v2450
        %2474 = vmatprep.subr.bf16.mxu0 0
        %2475 = vmatpush1.bf16.msra.mxu0 %v2451
        %2476 = vmatprep.subr.bf16.mxu0 0
        %2477 = vmatpush1.bf16.msra.mxu0 0
        %2478 = vmatprep.subr.bf16.mxu0 0
        %2479 = vmatpush1.bf16.msra.mxu0 0
        %2480 = vmatprep.subr.bf16.mxu0 0
        %2481 = vmatpush1.bf16.msra.mxu0 0
        %2482 = vmatprep.subr.bf16.mxu0 0
        %2483 = vmatpush1.bf16.msra.mxu0 0
        %2484 = vmatprep.subr.bf16.mxu0 0
        %2485 = vmatpush1.bf16.msra.mxu0 0
        %2486 = vmatprep.subr.bf16.mxu0 0
        %2487 = vmatpush1.bf16.msra.mxu0 0
        %2488 = vmatprep.subr.bf16.mxu0 0
        %2489 = vmatpush1.bf16.msra.mxu0 0
        %2490 = vmatprep.subr.bf16.mxu0 0
        %2491 = vmatpush1.bf16.msra.mxu0 0
        %2492 = vmatprep.mubr.bf16.mxu0 0
        %2493 = vmatmul.mubr.bf16.gmra.mrb[0].mxu0 %v2380
        %v2494 = vpop.f32.mrb[0].mxu0
        %v2495 = vadd.f32 %v2410, %v2494
        %v2496 = vpop.f32.mrb[0].mxu0
        %v2497 = vpop.f32.mrb[0].mxu0
        %v2498 = vadd.f32 %v2410, %v2497
        %v2499 = vpop.f32.mrb[0].mxu0
        %2500 = vmatprep.mubr.bf16.mxu0 0
        %2501 = vmatmul.mubr.bf16.gmra.mrb[0].mxu0 %v2381
        %v2502 = vpop.f32.mrb[0].mxu0
        %v2503 = vadd.f32 %v2410, %v2502
        %v2504 = vpop.f32.mrb[0].mxu0
        %v2505 = vpop.f32.mrb[0].mxu0
        %v2506 = vadd.f32 %v2410, %v2505
        %v2507 = vpop.f32.mrb[0].mxu0
        %2508 = vmatprep.mubr.bf16.mxu0 0
        %2509 = vmatmul.mubr.bf16.gmra.mrb[0].mxu0 %v2382
        %v2510 = vpop.f32.mrb[0].mxu0
        %v2511 = vadd.f32 %v2410, %v2510
        %v2512 = vpop.f32.mrb[0].mxu0
        %v2513 = vpop.f32.mrb[0].mxu0
        %v2514 = vadd.f32 %v2410, %v2513
        %v2515 = vpop.f32.mrb[0].mxu0
        %2516 = vmatprep.mubr.bf16.mxu0 0
        %2517 = vmatmul.mubr.bf16.gmra.mrb[0].mxu0 %v2383
        %v2518 = vpop.f32.mrb[0].mxu0
        %v2519 = vadd.f32 %v2410, %v2518
        %v2520 = vpop.f32.mrb[0].mxu0
        %v2521 = vpop.f32.mrb[0].mxu0
        %v2522 = vadd.f32 %v2410, %v2521
        %v2523 = vpop.f32.mrb[0].mxu0
        %2524 = vmatprep.mubr.bf16.mxu0 0
        %2525 = vmatmul.mubr.bf16.gmra.mrb[0].mxu0 %v2384
        %v2526 = vpop.f32.mrb[0].mxu0
        %v2527 = vadd.f32 %v2410, %v2526
        %v2528 = vpop.f32.mrb[0].mxu0
        %v2529 = vpop.f32.mrb[0].mxu0
        %v2530 = vadd.f32 %v2410, %v2529
        %v2531 = vpop.f32.mrb[0].mxu0
        %2532 = vmatprep.mubr.bf16.mxu0 0
        %2533 = vmatmul.mubr.bf16.gmra.mrb[0].mxu0 %v2385
        %v2534 = vpop.f32.mrb[0].mxu0
        %v2535 = vadd.f32 %v2410, %v2534
        %v2536 = vpop.f32.mrb[0].mxu0
        %v2537 = vpop.f32.mrb[0].mxu0
        %v2538 = vadd.f32 %v2410, %v2537
        %v2539 = vpop.f32.mrb[0].mxu0
        %2540 = vmatprep.mubr.bf16.mxu0 0
        %2541 = vmatmul.mubr.bf16.gmra.mrb[0].mxu0 %v2386
        %v2542 = vpop.f32.mrb[0].mxu0
        %v2543 = vadd.f32 %v2410, %v2542
        %v2544 = vpop.f32.mrb[0].mxu0
        %v2545 = vpop.f32.mrb[0].mxu0
        %v2546 = vadd.f32 %v2410, %v2545
        %v2547 = vpop.f32.mrb[0].mxu0
        %2548 = vmatprep.mubr.bf16.mxu0 0
        %2549 = vmatmul.mubr.bf16.gmra.mrb[0].mxu0 %v2387
        %v2550 = vpop.f32.mrb[0].mxu0
        %v2551 = vadd.f32 %v2410, %v2550
        %v2552 = vpop.f32.mrb[0].mxu0
        %v2553 = vpop.f32.mrb[0].mxu0
        %v2554 = vadd.f32 %v2410, %v2553
        %v2555 = vpop.f32.mrb[0].mxu0
        %2556 = vmatprep.mubr.bf16.mxu0 0
        %2557 = vmatmul.mubr.bf16.gmra.mrb[0].mxu0 %v2388
        %v2558 = vpop.f32.mrb[0].mxu0
        %v2559 = vadd.f32 %v2410, %v2558
        %v2560 = vpop.f32.mrb[0].mxu0
        %v2561 = vpop.f32.mrb[0].mxu0
        %v2562 = vadd.f32 %v2410, %v2561
        %v2563 = vpop.f32.mrb[0].mxu0
        %2564 = vdwg.mxu0
        %v2565 = vunpack.c.l.bf16 %v895
        %v2566 = vunpack.c.l.bf16 %v896
        %v2567 = vunpack.c.l.bf16 %v897
        %v2568 = vunpack.c.l.bf16 %v898
        %v2569 = vunpack.c.l.bf16 %v899
        %v2570 = vunpack.c.l.bf16 %v900
        %v2571 = vunpack.c.l.bf16 %v901
        %v2572 = vunpack.c.l.bf16 %v902
        %v2573 = vunpack.c.l.bf16 %v903
        %v2574 = vunpack.c.l.bf16 %v904
        %v2575 = vunpack.c.l.bf16 %v905
        %v2576 = vunpack.c.l.bf16 %v906
        %v2577 = vunpack.c.l.bf16 %v907
        %v2578 = vunpack.c.l.bf16 %v908
        %v2579 = vunpack.c.l.bf16 %v909
        %v2580 = vunpack.c.l.bf16 %v910
        %v2581 = vunpack.c.l.bf16 %v911
        %v2582 = vunpack.c.l.bf16 %v912
        %v2583 = vunpack.c.l.bf16 %v1136
        %v2584 = vsel %vm453, %v2565, 0.0
        %v2585 = vsel %vm453, %v2566, 0.0
        %v2586 = vsel %vm453, %v2567, 0.0
        %v2587 = vsel %vm453, %v2568, 0.0
        %v2588 = vsel %vm453, %v2569, 0.0
        %v2589 = vsel %vm453, %v2570, 0.0
        %v2590 = vsel %vm453, %v2571, 0.0
        %v2591 = vsel %vm453, %v2572, 0.0
        %v2592 = vsel %vm453, %v2573, 0.0
        %v2593 = vsel %vm453, %v2574, 0.0
        %v2594 = vsel %vm453, %v2575, 0.0
        %v2595 = vsel %vm453, %v2576, 0.0
        %v2596 = vsel %vm453, %v2577, 0.0
        %v2597 = vsel %vm453, %v2578, 0.0
        %v2598 = vsel %vm453, %v2579, 0.0
        %v2599 = vsel %vm453, %v2580, 0.0
        %v2600 = vsel %vm453, %v2581, 0.0
        %v2601 = vsel %vm453, %v2582, 0.0
        %v2602 = vsel %vm453, %v2583, 0.0
        %vm2622 = vcmask 1044480
        %v2623 = vrot.slane %v2584, 3
        %v2624 = vrot.slane %v2585, 3
        %v2625 = vsel %vm2622, %v2623, %v2624
        %v2626 = vrot.slane %v2586, 3
        %v2627 = vsel %vm2622, %v2624, %v2626
        %v2628 = vrot.slane %v2587, 3
        %v2629 = vsel %vm2622, %v2626, %v2628
        %v2630 = vrot.slane %v2588, 3
        %v2631 = vsel %vm2622, %v2628, %v2630
        %v2632 = vrot.slane %v2589, 3
        %v2633 = vsel %vm2622, %v2630, %v2632
        %v2634 = vrot.slane %v2590, 3
        %v2635 = vsel %vm2622, %v2632, %v2634
        %v2636 = vrot.slane %v2591, 3
        %v2637 = vsel %vm2622, %v2634, %v2636
        %v2638 = vrot.slane %v2592, 3
        %v2639 = vsel %vm2622, %v2636, %v2638
        %v2640 = vrot.slane %v2593, 3
        %v2641 = vsel %vm2622, %v2638, %v2640
        %v2642 = vrot.slane %v2594, 3
        %v2643 = vsel %vm2622, %v2640, %v2642
        %v2644 = vrot.slane %v2595, 3
        %v2645 = vsel %vm2622, %v2642, %v2644
        %v2646 = vrot.slane %v2596, 3
        %v2647 = vsel %vm2622, %v2644, %v2646
        %v2648 = vrot.slane %v2597, 3
        %v2649 = vsel %vm2622, %v2646, %v2648
        %v2650 = vrot.slane %v2598, 3
        %v2651 = vsel %vm2622, %v2648, %v2650
        %v2652 = vrot.slane %v2599, 3
        %v2653 = vsel %vm2622, %v2650, %v2652
        %v2654 = vrot.slane %v2600, 3
        %v2655 = vsel %vm2622, %v2652, %v2654
        %v2656 = vrot.slane %v2601, 3
        %v2657 = vsel %vm2622, %v2654, %v2656
        %v2658 = vrot.slane %v2602, 3
        %v2659 = vsel %vm2622, %v2656, %v2658
        %v2678 = vadd.f32 %v2495, %v2625
        %v2679 = vadd.f32 %v2498, %v2627
        %v2680 = vadd.f32 %v2503, %v2629
        %v2681 = vadd.f32 %v2506, %v2631
        %v2682 = vadd.f32 %v2511, %v2633
        %v2683 = vadd.f32 %v2514, %v2635
        %v2684 = vadd.f32 %v2519, %v2637
        %v2685 = vadd.f32 %v2522, %v2639
        %v2686 = vadd.f32 %v2527, %v2641
        %v2687 = vadd.f32 %v2530, %v2643
        %v2688 = vadd.f32 %v2535, %v2645
        %v2689 = vadd.f32 %v2538, %v2647
        %v2690 = vadd.f32 %v2543, %v2649
        %v2691 = vadd.f32 %v2546, %v2651
        %v2692 = vadd.f32 %v2551, %v2653
        %v2693 = vadd.f32 %v2554, %v2655
        %v2694 = vadd.f32 %v2559, %v2657
        %v2695 = vadd.f32 %v2562, %v2659
        %2696 = vst [vmem:[%s295] sm:$0xff] %v2678
        %2697 = vst [vmem:[%s295 + $0x8] sm:$0xff] %v2679
        %2698 = vst [vmem:[%s295 + $0x10] sm:$0xff] %v2680
        %2699 = vst [vmem:[%s295 + $0x18] sm:$0xff] %v2681
        %2700 = vst [vmem:[%s295 + $0x20] sm:$0xff] %v2682
        %2701 = vst [vmem:[%s295 + $0x28] sm:$0xff] %v2683
        %2702 = vst [vmem:[%s295 + $0x30] sm:$0xff] %v2684
        %2703 = vst [vmem:[%s295 + $0x38] sm:$0xff] %v2685
        %2704 = vst [vmem:[%s295 + $0x40] sm:$0xff] %v2686
        %2705 = vst [vmem:[%s295 + $0x48] sm:$0xff] %v2687
        %2706 = vst [vmem:[%s295 + $0x50] sm:$0xff] %v2688
        %2707 = vst [vmem:[%s295 + $0x58] sm:$0xff] %v2689
        %2708 = vst [vmem:[%s295 + $0x60] sm:$0xff] %v2690
        %2709 = vst [vmem:[%s295 + $0x68] sm:$0xff] %v2691
        %2710 = vst [vmem:[%s295 + $0x70] sm:$0xff] %v2692
        %2711 = vst [vmem:[%s295 + $0x78] sm:$0xff] %v2693
        %2712 = vst [vmem:[%s295 + $0x80] sm:$0xff] %v2694
        %2713 = vst [vmem:[%s295 + $0x88] sm:$0xff] %v2695
        %s2714 = sand.u32 %s197, 1
        %s2715 = scalar_lea.sflag [#allocation3], %s2714
        %s2716 = sand.u32 %s197, 1
        %s2717 = smul.addr %s2716, 144
        %s2718 = scalar_lea.vmem [#allocation2], %s2717
        // Predicated region
        $region49: #{tpu_custom_call.1} parent=47 // pred_check
          %p2719 = pneg %p207
        $region50: #{tpu_custom_call.1} parent=47 // pred_check_branch
          %2721 = sbr.rel (%p2719) target = $region52
        $region51: #{tpu_custom_call.1} parent=47 // pred_region
          %s2723 = ssub.s32 2304, 2304
          %2724 = vsyncadd %s2715, %s2723
          %s2725 = smul.addr %s26, 18
          %s2726 = smul.addr %s25, 36
          %s2727 = sadd.s32 %s2725, %s2726
          %s2728 = smul.addr %s2727, 128
          %s2729 = scalar_lea.hbm %s7, %s2728
          %s2730 = sshll.u32 %s2718, 4
          %s2731 = int_to_ptr.vmem [resolvable:$true] %s2730
          %2736 = dma.vmem_to_hbm [thread:$0]  %s2731, 2304, %s2729, %s2715, 128, 128, 8
        $region52: #{tpu_custom_call.1} parent=47 // pred_fallthru
          _
      $region48: #{tpu_custom_call.1} parent=5 // pred_fallthru
        _
      %p2737 = scmp.le.s32.totalorder 2, %s16
      // Predicated region
      $region53: #{tpu_custom_call.1} parent=5 // pred_check
        %p2738 = pneg %p2737
      $region54: #{tpu_custom_call.1} parent=5 // pred_check_branch
        %2740 = sbr.rel (%p2738) target = $region56
      $region55: #{tpu_custom_call.1} parent=5 // pred_region
        %s2741 = ssub.s32 %s16, 2
        // Predicated region
        $region57: #{tpu_custom_call.1} parent=55 // pred_check
          %p2742 = pneg %p213
        $region58: #{tpu_custom_call.1} parent=55 // pred_check_branch
          %2744 = sbr.rel (%p2742) target = $region60
        $region59: #{tpu_custom_call.1} parent=55 // pred_region
          %s2745 = sand.u32 %s198, 1
          %s2746 = scalar_lea.sflag [#allocation3], %s2745
          %s2747 = sand.u32 %s198, 1
          %s2748 = smul.addr %s2747, 144
          %s2749 = scalar_lea.vmem [#allocation2], %s2748
          %2750 = dma.done %s2746, 2304
        $region60: #{tpu_custom_call.1} parent=55 // pred_fallthru
          _
      $region56: #{tpu_custom_call.1} parent=5 // pred_fallthru
        _
    $region6: #{tpu_custom_call.1} parent=1 // loop_footer
      %s20 = sadd.s32 1, %s16
    $region7: #{tpu_custom_call.1} parent=1 // loop_footer_branch
      %15 = sbr.rel target = $region3
    $region8: #{tpu_custom_call.1} parent=1 // loop_exit
      _
    %2751 = vsyncpa [#allocation3], 1
    %s2752 = scalar_lea.sflag [#allocation3], 1
    %2753 = vsyncpa %s2752, 1

</llo_original>
